<compile_context>
chip_gen: v5e
topology: v5e:2x2
jax: 0.10.0
libtpu: 0.0.40
codegen_flags: <defaults>
</compile_context>

<pallas_src>
import math

import jax
import jax.numpy as jnp
from jax.experimental import pallas as pl
from jax.experimental.pallas import tpu as pltpu

C_IN = 3
C_OUT = 8
D_KEY = 8
INV_SCALE = 1.0 / math.sqrt(float(D_KEY))  # module scales by sqrt(d_key=8)


def fused_conv_attn_kernel(x_ref, w_ref, b_ref, o_ref):
    # x_ref: (GB, C_IN, N, N)   zero-padded input block (VMEM)
    # w_ref: (C_OUT, C_IN)      1x1 conv weight (SMEM, read as scalars)
    # b_ref: (C_OUT,)           conv bias (SMEM, read as scalars)
    # o_ref: (GB, C_OUT, N, N)  attention output block (VMEM)
    gb = x_ref.shape[0]
    n = x_ref.shape[2]

    # ---- 1x1 conv: K=3 is far too small for the MXU, so do unrolled VPU
    # multiply-adds with *scalar* weights/bias from SMEM (free scalar-slot
    # broadcast, no XLU relayout).  Border pixels of the zero-padded input
    # contribute nothing, so the padded conv border is exactly the bias.
    slabs = []
    for bi in range(gb):
        xc = [x_ref[bi, k].astype(jnp.float32) for k in range(C_IN)]
        for o in range(C_OUT):
            acc = xc[0] * w_ref[o, 0]
            for k in range(1, C_IN):
                acc = acc + xc[k] * w_ref[o, k]
            slabs.append(acc + b_ref[o])
    x2 = jnp.stack(slabs, axis=0)            # (GB*C_OUT, n, n) f32
    x2_b = x2.astype(jnp.bfloat16)           # bf16 MXU operands, f32 accum

    # ---- batched scaled-dot-product self-attention over all GB*C_OUT slices.
    s = jnp.einsum("gqd,gkd->gqk", x2_b, x2_b,
                   preferred_element_type=jnp.float32) * INV_SCALE
    s = s - jnp.max(s, axis=-1, keepdims=True)          # f32 softmax
    p = jnp.exp(s)                                       # EUP
    p = p * pl.reciprocal(jnp.sum(p, axis=-1, keepdims=True), approx=True)
    y = jnp.einsum("gqk,gkd->gqd", p.astype(jnp.bfloat16), x2_b,
                   preferred_element_type=jnp.float32)

    o_ref[...] = y.reshape(gb, C_OUT, n, n).astype(o_ref.dtype)


def model_forward(x1, conv_w, conv_b):
    B, c_in, H, W = x1.shape
    assert c_in == C_IN
    # Conv2d padding=1: pad the small raw input once; the fused kernel never
    # materializes the larger x2 intermediate in HBM.
    x_pad = jnp.pad(x1, ((0, 0), (0, 0), (1, 1), (1, 1)))
    N = H + 2
    w2d = conv_w.reshape(C_OUT, C_IN).astype(jnp.float32)
    b1d = conv_b.reshape(C_OUT).astype(jnp.float32)

    # Two parallel steps when B is even (keeps both v7x TCs busy); each step
    # processes GB = B // steps batches at once.
    steps = 2 if (B >= 2 and B % 2 == 0) else 1
    gb = B // steps

    flops = (B * C_OUT * N * N * 2 * C_IN      # 1x1 conv MADs
             + 4 * B * C_OUT * N * N * N)      # QK^T and PV matmuls
    bytes_accessed = 4 * (B * C_IN * N * N + B * C_OUT * N * N
                          + C_OUT * C_IN + C_OUT)
    transcendentals = B * C_OUT * N * N        # softmax exp

    return pl.pallas_call(
        fused_conv_attn_kernel,
        out_shape=jax.ShapeDtypeStruct((B, C_OUT, N, N), x1.dtype),
        grid=(steps,),
        in_specs=[
            pl.BlockSpec((gb, C_IN, N, N), lambda i: (i, 0, 0, 0)),
            pl.BlockSpec(memory_space=pltpu.MemorySpace.SMEM),
            pl.BlockSpec(memory_space=pltpu.MemorySpace.SMEM),
        ],
        out_specs=pl.BlockSpec((gb, C_OUT, N, N), lambda i: (i, 0, 0, 0)),
        compiler_params=pltpu.CompilerParams(dimension_semantics=("parallel",)),
        cost_estimate=pl.CostEstimate(flops=flops,
                                      bytes_accessed=bytes_accessed,
                                      transcendentals=transcendentals),
    )(x_pad, w2d, b1d)


def model_forward_ref(x1, conv_w, conv_b, mxu_bf16=False):
    # Pure-JAX reference.  mxu_bf16=True mimics the kernel's bf16 MXU operands
    # (f32 accumulation), so the kernel can be checked with a tight tolerance.
    x_pad = jnp.pad(x1, ((0, 0), (0, 0), (1, 1), (1, 1)))
    w2d = conv_w.reshape(C_OUT, C_IN)
    x2 = (jnp.einsum("oc,bchw->bohw", w2d, x_pad,
                     precision=jax.lax.Precision.HIGHEST)
          + conv_b[None, :, None, None])
    q = x2.astype(jnp.bfloat16) if mxu_bf16 else x2
    s = jnp.einsum("bchw,bcvw->bchv", q, q,
                   preferred_element_type=jnp.float32,
                   precision=jax.lax.Precision.HIGHEST) * INV_SCALE
    p = jax.nn.softmax(s, axis=-1)
    pq = p.astype(jnp.bfloat16) if mxu_bf16 else p
    y = jnp.einsum("bchv,bcvw->bchw", pq, q,
                   preferred_element_type=jnp.float32,
                   precision=jax.lax.Precision.HIGHEST)
    return y.astype(x1.dtype)


if __name__ == "__main__":
    key = jax.random.PRNGKey(0)
    k_x, k_w, k_b = jax.random.split(key, 3)

    # Small shapes consistent with the module (original: 8, 3, 64, 64).
    B, H, W = 4, 16, 16
    x1 = jax.random.normal(k_x, (B, C_IN, H, W), dtype=jnp.float32)

    # Deterministic Conv2d(3, 8, 1) params (kaiming-uniform-like bounds, fan_in=3)
    bound = 1.0 / math.sqrt(C_IN)
    conv_w = jax.random.uniform(k_w, (C_OUT, C_IN, 1, 1), dtype=jnp.float32,
                                minval=-bound, maxval=bound)
    conv_b = jax.random.uniform(k_b, (C_OUT,), dtype=jnp.float32,
                                minval=-bound, maxval=bound)

    y = model_forward(x1, conv_w, conv_b)
    jax.block_until_ready(y)
    assert y.shape == (B, C_OUT, H + 2, W + 2), y.shape

    # Tight check vs a reference with matching bf16 MXU-operand rounding
    # (remaining diff: EUP approximate reciprocal in softmax, ~2^-12 rel).
    y_match = model_forward_ref(x1, conv_w, conv_b, mxu_bf16=True)
    assert jnp.allclose(y, y_match, atol=5e-3, rtol=5e-3), \
        float(jnp.max(jnp.abs(y - y_match)))

    # Loose sanity check vs the full-f32 reference (covers bf16 operand rounding).
    y_f32 = model_forward_ref(x1, conv_w, conv_b, mxu_bf16=False)
    assert jnp.allclose(y, y_f32, atol=5e-2, rtol=5e-2), \
        float(jnp.max(jnp.abs(y - y_f32)))

    print("KERNEL_OK")
</pallas_src>

<mosaic_0001>
module attributes {stable_mosaic.version = 11 : i64} {
  func.func @fused_conv_attn_kernel(%arg0: i32, %arg1: memref<2x3x18x18xf32, #tpu.memory_space<vmem>>, %arg2: memref<8x3xf32, #tpu.memory_space<smem>>, %arg3: memref<8xf32, #tpu.memory_space<smem>>, %arg4: memref<2x8x18x18xf32, #tpu.memory_space<vmem>>) attributes {dimension_semantics = [#tpu.dimension_semantics<parallel>], iteration_bounds = array<i64: 2>, scalar_prefetch = 0 : i64, scratch_operands = 0 : i64, tpu.core_type = #tpu.core_type<tc>, window_params = [{transform_indices = @transform_0, window_bounds = array<i64: 2, 3, 18, 18>}, {transform_indices = @transform_1, window_bounds = array<i64: 8, 3>}, {transform_indices = @transform_2, window_bounds = array<i64: 8>}, {transform_indices = @transform_3, window_bounds = array<i64: 2, 8, 18, 18>}]} {
    %c0 = arith.constant 0 : index
    %c0_0 = arith.constant 0 : index
    %c0_1 = arith.constant 0 : index
    %c0_2 = arith.constant 0 : index
    %0 = vector.load %arg1[%c0, %c0_0, %c0_1, %c0_2] : memref<2x3x18x18xf32, #tpu.memory_space<vmem>>, vector<1x1x18x18xf32>
    %1 = vector.shape_cast %0 : vector<1x1x18x18xf32> to vector<18x18xf32>
    %c0_3 = arith.constant 0 : index
    %c1 = arith.constant 1 : index
    %c0_4 = arith.constant 0 : index
    %c0_5 = arith.constant 0 : index
    %2 = vector.load %arg1[%c0_3, %c1, %c0_4, %c0_5] : memref<2x3x18x18xf32, #tpu.memory_space<vmem>>, vector<1x1x18x18xf32>
    %3 = vector.shape_cast %2 : vector<1x1x18x18xf32> to vector<18x18xf32>
    %c0_6 = arith.constant 0 : index
    %c2 = arith.constant 2 : index
    %c0_7 = arith.constant 0 : index
    %c0_8 = arith.constant 0 : index
    %4 = vector.load %arg1[%c0_6, %c2, %c0_7, %c0_8] : memref<2x3x18x18xf32, #tpu.memory_space<vmem>>, vector<1x1x18x18xf32>
    %5 = vector.shape_cast %4 : vector<1x1x18x18xf32> to vector<18x18xf32>
    %c0_9 = arith.constant 0 : index
    %c0_10 = arith.constant 0 : index
    %6 = memref.load %arg2[%c0_9, %c0_10] : memref<8x3xf32, #tpu.memory_space<smem>>
    %7 = vector.broadcast %6 : f32 to vector<18x18xf32>
    %8 = arith.mulf %1, %7 : vector<18x18xf32>
    %c0_11 = arith.constant 0 : index
    %c1_12 = arith.constant 1 : index
    %9 = memref.load %arg2[%c0_11, %c1_12] : memref<8x3xf32, #tpu.memory_space<smem>>
    %10 = vector.broadcast %9 : f32 to vector<18x18xf32>
    %11 = arith.mulf %3, %10 : vector<18x18xf32>
    %12 = arith.addf %8, %11 : vector<18x18xf32>
    %c0_13 = arith.constant 0 : index
    %c2_14 = arith.constant 2 : index
    %13 = memref.load %arg2[%c0_13, %c2_14] : memref<8x3xf32, #tpu.memory_space<smem>>
    %14 = vector.broadcast %13 : f32 to vector<18x18xf32>
    %15 = arith.mulf %5, %14 : vector<18x18xf32>
    %16 = arith.addf %12, %15 : vector<18x18xf32>
    %c0_15 = arith.constant 0 : index
    %17 = memref.load %arg3[%c0_15] : memref<8xf32, #tpu.memory_space<smem>>
    %18 = vector.broadcast %17 : f32 to vector<18x18xf32>
    %19 = arith.addf %16, %18 : vector<18x18xf32>
    %c1_16 = arith.constant 1 : index
    %c0_17 = arith.constant 0 : index
    %20 = memref.load %arg2[%c1_16, %c0_17] : memref<8x3xf32, #tpu.memory_space<smem>>
    %21 = vector.broadcast %20 : f32 to vector<18x18xf32>
    %22 = arith.mulf %1, %21 : vector<18x18xf32>
    %c1_18 = arith.constant 1 : index
    %c1_19 = arith.constant 1 : index
    %23 = memref.load %arg2[%c1_18, %c1_19] : memref<8x3xf32, #tpu.memory_space<smem>>
    %24 = vector.broadcast %23 : f32 to vector<18x18xf32>
    %25 = arith.mulf %3, %24 : vector<18x18xf32>
    %26 = arith.addf %22, %25 : vector<18x18xf32>
    %c1_20 = arith.constant 1 : index
    %c2_21 = arith.constant 2 : index
    %27 = memref.load %arg2[%c1_20, %c2_21] : memref<8x3xf32, #tpu.memory_space<smem>>
    %28 = vector.broadcast %27 : f32 to vector<18x18xf32>
    %29 = arith.mulf %5, %28 : vector<18x18xf32>
    %30 = arith.addf %26, %29 : vector<18x18xf32>
    %c1_22 = arith.constant 1 : index
    %31 = memref.load %arg3[%c1_22] : memref<8xf32, #tpu.memory_space<smem>>
    %32 = vector.broadcast %31 : f32 to vector<18x18xf32>
    %33 = arith.addf %30, %32 : vector<18x18xf32>
    %c2_23 = arith.constant 2 : index
    %c0_24 = arith.constant 0 : index
    %34 = memref.load %arg2[%c2_23, %c0_24] : memref<8x3xf32, #tpu.memory_space<smem>>
    %35 = vector.broadcast %34 : f32 to vector<18x18xf32>
    %36 = arith.mulf %1, %35 : vector<18x18xf32>
    %c2_25 = arith.constant 2 : index
    %c1_26 = arith.constant 1 : index
    %37 = memref.load %arg2[%c2_25, %c1_26] : memref<8x3xf32, #tpu.memory_space<smem>>
    %38 = vector.broadcast %37 : f32 to vector<18x18xf32>
    %39 = arith.mulf %3, %38 : vector<18x18xf32>
    %40 = arith.addf %36, %39 : vector<18x18xf32>
    %c2_27 = arith.constant 2 : index
    %c2_28 = arith.constant 2 : index
    %41 = memref.load %arg2[%c2_27, %c2_28] : memref<8x3xf32, #tpu.memory_space<smem>>
    %42 = vector.broadcast %41 : f32 to vector<18x18xf32>
    %43 = arith.mulf %5, %42 : vector<18x18xf32>
    %44 = arith.addf %40, %43 : vector<18x18xf32>
    %c2_29 = arith.constant 2 : index
    %45 = memref.load %arg3[%c2_29] : memref<8xf32, #tpu.memory_space<smem>>
    %46 = vector.broadcast %45 : f32 to vector<18x18xf32>
    %47 = arith.addf %44, %46 : vector<18x18xf32>
    %c3 = arith.constant 3 : index
    %c0_30 = arith.constant 0 : index
    %48 = memref.load %arg2[%c3, %c0_30] : memref<8x3xf32, #tpu.memory_space<smem>>
    %49 = vector.broadcast %48 : f32 to vector<18x18xf32>
    %50 = arith.mulf %1, %49 : vector<18x18xf32>
    %c3_31 = arith.constant 3 : index
    %c1_32 = arith.constant 1 : index
    %51 = memref.load %arg2[%c3_31, %c1_32] : memref<8x3xf32, #tpu.memory_space<smem>>
    %52 = vector.broadcast %51 : f32 to vector<18x18xf32>
    %53 = arith.mulf %3, %52 : vector<18x18xf32>
    %54 = arith.addf %50, %53 : vector<18x18xf32>
    %c3_33 = arith.constant 3 : index
    %c2_34 = arith.constant 2 : index
    %55 = memref.load %arg2[%c3_33, %c2_34] : memref<8x3xf32, #tpu.memory_space<smem>>
    %56 = vector.broadcast %55 : f32 to vector<18x18xf32>
    %57 = arith.mulf %5, %56 : vector<18x18xf32>
    %58 = arith.addf %54, %57 : vector<18x18xf32>
    %c3_35 = arith.constant 3 : index
    %59 = memref.load %arg3[%c3_35] : memref<8xf32, #tpu.memory_space<smem>>
    %60 = vector.broadcast %59 : f32 to vector<18x18xf32>
    %61 = arith.addf %58, %60 : vector<18x18xf32>
    %c4 = arith.constant 4 : index
    %c0_36 = arith.constant 0 : index
    %62 = memref.load %arg2[%c4, %c0_36] : memref<8x3xf32, #tpu.memory_space<smem>>
    %63 = vector.broadcast %62 : f32 to vector<18x18xf32>
    %64 = arith.mulf %1, %63 : vector<18x18xf32>
    %c4_37 = arith.constant 4 : index
    %c1_38 = arith.constant 1 : index
    %65 = memref.load %arg2[%c4_37, %c1_38] : memref<8x3xf32, #tpu.memory_space<smem>>
    %66 = vector.broadcast %65 : f32 to vector<18x18xf32>
    %67 = arith.mulf %3, %66 : vector<18x18xf32>
    %68 = arith.addf %64, %67 : vector<18x18xf32>
    %c4_39 = arith.constant 4 : index
    %c2_40 = arith.constant 2 : index
    %69 = memref.load %arg2[%c4_39, %c2_40] : memref<8x3xf32, #tpu.memory_space<smem>>
    %70 = vector.broadcast %69 : f32 to vector<18x18xf32>
    %71 = arith.mulf %5, %70 : vector<18x18xf32>
    %72 = arith.addf %68, %71 : vector<18x18xf32>
    %c4_41 = arith.constant 4 : index
    %73 = memref.load %arg3[%c4_41] : memref<8xf32, #tpu.memory_space<smem>>
    %74 = vector.broadcast %73 : f32 to vector<18x18xf32>
    %75 = arith.addf %72, %74 : vector<18x18xf32>
    %c5 = arith.constant 5 : index
    %c0_42 = arith.constant 0 : index
    %76 = memref.load %arg2[%c5, %c0_42] : memref<8x3xf32, #tpu.memory_space<smem>>
    %77 = vector.broadcast %76 : f32 to vector<18x18xf32>
    %78 = arith.mulf %1, %77 : vector<18x18xf32>
    %c5_43 = arith.constant 5 : index
    %c1_44 = arith.constant 1 : index
    %79 = memref.load %arg2[%c5_43, %c1_44] : memref<8x3xf32, #tpu.memory_space<smem>>
    %80 = vector.broadcast %79 : f32 to vector<18x18xf32>
    %81 = arith.mulf %3, %80 : vector<18x18xf32>
    %82 = arith.addf %78, %81 : vector<18x18xf32>
    %c5_45 = arith.constant 5 : index
    %c2_46 = arith.constant 2 : index
    %83 = memref.load %arg2[%c5_45, %c2_46] : memref<8x3xf32, #tpu.memory_space<smem>>
    %84 = vector.broadcast %83 : f32 to vector<18x18xf32>
    %85 = arith.mulf %5, %84 : vector<18x18xf32>
    %86 = arith.addf %82, %85 : vector<18x18xf32>
    %c5_47 = arith.constant 5 : index
    %87 = memref.load %arg3[%c5_47] : memref<8xf32, #tpu.memory_space<smem>>
    %88 = vector.broadcast %87 : f32 to vector<18x18xf32>
    %89 = arith.addf %86, %88 : vector<18x18xf32>
    %c6 = arith.constant 6 : index
    %c0_48 = arith.constant 0 : index
    %90 = memref.load %arg2[%c6, %c0_48] : memref<8x3xf32, #tpu.memory_space<smem>>
    %91 = vector.broadcast %90 : f32 to vector<18x18xf32>
    %92 = arith.mulf %1, %91 : vector<18x18xf32>
    %c6_49 = arith.constant 6 : index
    %c1_50 = arith.constant 1 : index
    %93 = memref.load %arg2[%c6_49, %c1_50] : memref<8x3xf32, #tpu.memory_space<smem>>
    %94 = vector.broadcast %93 : f32 to vector<18x18xf32>
    %95 = arith.mulf %3, %94 : vector<18x18xf32>
    %96 = arith.addf %92, %95 : vector<18x18xf32>
    %c6_51 = arith.constant 6 : index
    %c2_52 = arith.constant 2 : index
    %97 = memref.load %arg2[%c6_51, %c2_52] : memref<8x3xf32, #tpu.memory_space<smem>>
    %98 = vector.broadcast %97 : f32 to vector<18x18xf32>
    %99 = arith.mulf %5, %98 : vector<18x18xf32>
    %100 = arith.addf %96, %99 : vector<18x18xf32>
    %c6_53 = arith.constant 6 : index
    %101 = memref.load %arg3[%c6_53] : memref<8xf32, #tpu.memory_space<smem>>
    %102 = vector.broadcast %101 : f32 to vector<18x18xf32>
    %103 = arith.addf %100, %102 : vector<18x18xf32>
    %c7 = arith.constant 7 : index
    %c0_54 = arith.constant 0 : index
    %104 = memref.load %arg2[%c7, %c0_54] : memref<8x3xf32, #tpu.memory_space<smem>>
    %105 = vector.broadcast %104 : f32 to vector<18x18xf32>
    %106 = arith.mulf %1, %105 : vector<18x18xf32>
    %c7_55 = arith.constant 7 : index
    %c1_56 = arith.constant 1 : index
    %107 = memref.load %arg2[%c7_55, %c1_56] : memref<8x3xf32, #tpu.memory_space<smem>>
    %108 = vector.broadcast %107 : f32 to vector<18x18xf32>
    %109 = arith.mulf %3, %108 : vector<18x18xf32>
    %110 = arith.addf %106, %109 : vector<18x18xf32>
    %c7_57 = arith.constant 7 : index
    %c2_58 = arith.constant 2 : index
    %111 = memref.load %arg2[%c7_57, %c2_58] : memref<8x3xf32, #tpu.memory_space<smem>>
    %112 = vector.broadcast %111 : f32 to vector<18x18xf32>
    %113 = arith.mulf %5, %112 : vector<18x18xf32>
    %114 = arith.addf %110, %113 : vector<18x18xf32>
    %c7_59 = arith.constant 7 : index
    %115 = memref.load %arg3[%c7_59] : memref<8xf32, #tpu.memory_space<smem>>
    %116 = vector.broadcast %115 : f32 to vector<18x18xf32>
    %117 = arith.addf %114, %116 : vector<18x18xf32>
    %c1_60 = arith.constant 1 : index
    %c0_61 = arith.constant 0 : index
    %c0_62 = arith.constant 0 : index
    %c0_63 = arith.constant 0 : index
    %118 = vector.load %arg1[%c1_60, %c0_61, %c0_62, %c0_63] : memref<2x3x18x18xf32, #tpu.memory_space<vmem>>, vector<1x1x18x18xf32>
    %119 = vector.shape_cast %118 : vector<1x1x18x18xf32> to vector<18x18xf32>
    %c1_64 = arith.constant 1 : index
    %c1_65 = arith.constant 1 : index
    %c0_66 = arith.constant 0 : index
    %c0_67 = arith.constant 0 : index
    %120 = vector.load %arg1[%c1_64, %c1_65, %c0_66, %c0_67] : memref<2x3x18x18xf32, #tpu.memory_space<vmem>>, vector<1x1x18x18xf32>
    %121 = vector.shape_cast %120 : vector<1x1x18x18xf32> to vector<18x18xf32>
    %c1_68 = arith.constant 1 : index
    %c2_69 = arith.constant 2 : index
    %c0_70 = arith.constant 0 : index
    %c0_71 = arith.constant 0 : index
    %122 = vector.load %arg1[%c1_68, %c2_69, %c0_70, %c0_71] : memref<2x3x18x18xf32, #tpu.memory_space<vmem>>, vector<1x1x18x18xf32>
    %123 = vector.shape_cast %122 : vector<1x1x18x18xf32> to vector<18x18xf32>
    %c0_72 = arith.constant 0 : index
    %c0_73 = arith.constant 0 : index
    %124 = memref.load %arg2[%c0_72, %c0_73] : memref<8x3xf32, #tpu.memory_space<smem>>
    %125 = vector.broadcast %124 : f32 to vector<18x18xf32>
    %126 = arith.mulf %119, %125 : vector<18x18xf32>
    %c0_74 = arith.constant 0 : index
    %c1_75 = arith.constant 1 : index
    %127 = memref.load %arg2[%c0_74, %c1_75] : memref<8x3xf32, #tpu.memory_space<smem>>
    %128 = vector.broadcast %127 : f32 to vector<18x18xf32>
    %129 = arith.mulf %121, %128 : vector<18x18xf32>
    %130 = arith.addf %126, %129 : vector<18x18xf32>
    %c0_76 = arith.constant 0 : index
    %c2_77 = arith.constant 2 : index
    %131 = memref.load %arg2[%c0_76, %c2_77] : memref<8x3xf32, #tpu.memory_space<smem>>
    %132 = vector.broadcast %131 : f32 to vector<18x18xf32>
    %133 = arith.mulf %123, %132 : vector<18x18xf32>
    %134 = arith.addf %130, %133 : vector<18x18xf32>
    %c0_78 = arith.constant 0 : index
    %135 = memref.load %arg3[%c0_78] : memref<8xf32, #tpu.memory_space<smem>>
    %136 = vector.broadcast %135 : f32 to vector<18x18xf32>
    %137 = arith.addf %134, %136 : vector<18x18xf32>
    %c1_79 = arith.constant 1 : index
    %c0_80 = arith.constant 0 : index
    %138 = memref.load %arg2[%c1_79, %c0_80] : memref<8x3xf32, #tpu.memory_space<smem>>
    %139 = vector.broadcast %138 : f32 to vector<18x18xf32>
    %140 = arith.mulf %119, %139 : vector<18x18xf32>
    %c1_81 = arith.constant 1 : index
    %c1_82 = arith.constant 1 : index
    %141 = memref.load %arg2[%c1_81, %c1_82] : memref<8x3xf32, #tpu.memory_space<smem>>
    %142 = vector.broadcast %141 : f32 to vector<18x18xf32>
    %143 = arith.mulf %121, %142 : vector<18x18xf32>
    %144 = arith.addf %140, %143 : vector<18x18xf32>
    %c1_83 = arith.constant 1 : index
    %c2_84 = arith.constant 2 : index
    %145 = memref.load %arg2[%c1_83, %c2_84] : memref<8x3xf32, #tpu.memory_space<smem>>
    %146 = vector.broadcast %145 : f32 to vector<18x18xf32>
    %147 = arith.mulf %123, %146 : vector<18x18xf32>
    %148 = arith.addf %144, %147 : vector<18x18xf32>
    %c1_85 = arith.constant 1 : index
    %149 = memref.load %arg3[%c1_85] : memref<8xf32, #tpu.memory_space<smem>>
    %150 = vector.broadcast %149 : f32 to vector<18x18xf32>
    %151 = arith.addf %148, %150 : vector<18x18xf32>
    %c2_86 = arith.constant 2 : index
    %c0_87 = arith.constant 0 : index
    %152 = memref.load %arg2[%c2_86, %c0_87] : memref<8x3xf32, #tpu.memory_space<smem>>
    %153 = vector.broadcast %152 : f32 to vector<18x18xf32>
    %154 = arith.mulf %119, %153 : vector<18x18xf32>
    %c2_88 = arith.constant 2 : index
    %c1_89 = arith.constant 1 : index
    %155 = memref.load %arg2[%c2_88, %c1_89] : memref<8x3xf32, #tpu.memory_space<smem>>
    %156 = vector.broadcast %155 : f32 to vector<18x18xf32>
    %157 = arith.mulf %121, %156 : vector<18x18xf32>
    %158 = arith.addf %154, %157 : vector<18x18xf32>
    %c2_90 = arith.constant 2 : index
    %c2_91 = arith.constant 2 : index
    %159 = memref.load %arg2[%c2_90, %c2_91] : memref<8x3xf32, #tpu.memory_space<smem>>
    %160 = vector.broadcast %159 : f32 to vector<18x18xf32>
    %161 = arith.mulf %123, %160 : vector<18x18xf32>
    %162 = arith.addf %158, %161 : vector<18x18xf32>
    %c2_92 = arith.constant 2 : index
    %163 = memref.load %arg3[%c2_92] : memref<8xf32, #tpu.memory_space<smem>>
    %164 = vector.broadcast %163 : f32 to vector<18x18xf32>
    %165 = arith.addf %162, %164 : vector<18x18xf32>
    %c3_93 = arith.constant 3 : index
    %c0_94 = arith.constant 0 : index
    %166 = memref.load %arg2[%c3_93, %c0_94] : memref<8x3xf32, #tpu.memory_space<smem>>
    %167 = vector.broadcast %166 : f32 to vector<18x18xf32>
    %168 = arith.mulf %119, %167 : vector<18x18xf32>
    %c3_95 = arith.constant 3 : index
    %c1_96 = arith.constant 1 : index
    %169 = memref.load %arg2[%c3_95, %c1_96] : memref<8x3xf32, #tpu.memory_space<smem>>
    %170 = vector.broadcast %169 : f32 to vector<18x18xf32>
    %171 = arith.mulf %121, %170 : vector<18x18xf32>
    %172 = arith.addf %168, %171 : vector<18x18xf32>
    %c3_97 = arith.constant 3 : index
    %c2_98 = arith.constant 2 : index
    %173 = memref.load %arg2[%c3_97, %c2_98] : memref<8x3xf32, #tpu.memory_space<smem>>
    %174 = vector.broadcast %173 : f32 to vector<18x18xf32>
    %175 = arith.mulf %123, %174 : vector<18x18xf32>
    %176 = arith.addf %172, %175 : vector<18x18xf32>
    %c3_99 = arith.constant 3 : index
    %177 = memref.load %arg3[%c3_99] : memref<8xf32, #tpu.memory_space<smem>>
    %178 = vector.broadcast %177 : f32 to vector<18x18xf32>
    %179 = arith.addf %176, %178 : vector<18x18xf32>
    %c4_100 = arith.constant 4 : index
    %c0_101 = arith.constant 0 : index
    %180 = memref.load %arg2[%c4_100, %c0_101] : memref<8x3xf32, #tpu.memory_space<smem>>
    %181 = vector.broadcast %180 : f32 to vector<18x18xf32>
    %182 = arith.mulf %119, %181 : vector<18x18xf32>
    %c4_102 = arith.constant 4 : index
    %c1_103 = arith.constant 1 : index
    %183 = memref.load %arg2[%c4_102, %c1_103] : memref<8x3xf32, #tpu.memory_space<smem>>
    %184 = vector.broadcast %183 : f32 to vector<18x18xf32>
    %185 = arith.mulf %121, %184 : vector<18x18xf32>
    %186 = arith.addf %182, %185 : vector<18x18xf32>
    %c4_104 = arith.constant 4 : index
    %c2_105 = arith.constant 2 : index
    %187 = memref.load %arg2[%c4_104, %c2_105] : memref<8x3xf32, #tpu.memory_space<smem>>
    %188 = vector.broadcast %187 : f32 to vector<18x18xf32>
    %189 = arith.mulf %123, %188 : vector<18x18xf32>
    %190 = arith.addf %186, %189 : vector<18x18xf32>
    %c4_106 = arith.constant 4 : index
    %191 = memref.load %arg3[%c4_106] : memref<8xf32, #tpu.memory_space<smem>>
    %192 = vector.broadcast %191 : f32 to vector<18x18xf32>
    %193 = arith.addf %190, %192 : vector<18x18xf32>
    %c5_107 = arith.constant 5 : index
    %c0_108 = arith.constant 0 : index
    %194 = memref.load %arg2[%c5_107, %c0_108] : memref<8x3xf32, #tpu.memory_space<smem>>
    %195 = vector.broadcast %194 : f32 to vector<18x18xf32>
    %196 = arith.mulf %119, %195 : vector<18x18xf32>
    %c5_109 = arith.constant 5 : index
    %c1_110 = arith.constant 1 : index
    %197 = memref.load %arg2[%c5_109, %c1_110] : memref<8x3xf32, #tpu.memory_space<smem>>
    %198 = vector.broadcast %197 : f32 to vector<18x18xf32>
    %199 = arith.mulf %121, %198 : vector<18x18xf32>
    %200 = arith.addf %196, %199 : vector<18x18xf32>
    %c5_111 = arith.constant 5 : index
    %c2_112 = arith.constant 2 : index
    %201 = memref.load %arg2[%c5_111, %c2_112] : memref<8x3xf32, #tpu.memory_space<smem>>
    %202 = vector.broadcast %201 : f32 to vector<18x18xf32>
    %203 = arith.mulf %123, %202 : vector<18x18xf32>
    %204 = arith.addf %200, %203 : vector<18x18xf32>
    %c5_113 = arith.constant 5 : index
    %205 = memref.load %arg3[%c5_113] : memref<8xf32, #tpu.memory_space<smem>>
    %206 = vector.broadcast %205 : f32 to vector<18x18xf32>
    %207 = arith.addf %204, %206 : vector<18x18xf32>
    %c6_114 = arith.constant 6 : index
    %c0_115 = arith.constant 0 : index
    %208 = memref.load %arg2[%c6_114, %c0_115] : memref<8x3xf32, #tpu.memory_space<smem>>
    %209 = vector.broadcast %208 : f32 to vector<18x18xf32>
    %210 = arith.mulf %119, %209 : vector<18x18xf32>
    %c6_116 = arith.constant 6 : index
    %c1_117 = arith.constant 1 : index
    %211 = memref.load %arg2[%c6_116, %c1_117] : memref<8x3xf32, #tpu.memory_space<smem>>
    %212 = vector.broadcast %211 : f32 to vector<18x18xf32>
    %213 = arith.mulf %121, %212 : vector<18x18xf32>
    %214 = arith.addf %210, %213 : vector<18x18xf32>
    %c6_118 = arith.constant 6 : index
    %c2_119 = arith.constant 2 : index
    %215 = memref.load %arg2[%c6_118, %c2_119] : memref<8x3xf32, #tpu.memory_space<smem>>
    %216 = vector.broadcast %215 : f32 to vector<18x18xf32>
    %217 = arith.mulf %123, %216 : vector<18x18xf32>
    %218 = arith.addf %214, %217 : vector<18x18xf32>
    %c6_120 = arith.constant 6 : index
    %219 = memref.load %arg3[%c6_120] : memref<8xf32, #tpu.memory_space<smem>>
    %220 = vector.broadcast %219 : f32 to vector<18x18xf32>
    %221 = arith.addf %218, %220 : vector<18x18xf32>
    %c7_121 = arith.constant 7 : index
    %c0_122 = arith.constant 0 : index
    %222 = memref.load %arg2[%c7_121, %c0_122] : memref<8x3xf32, #tpu.memory_space<smem>>
    %223 = vector.broadcast %222 : f32 to vector<18x18xf32>
    %224 = arith.mulf %119, %223 : vector<18x18xf32>
    %c7_123 = arith.constant 7 : index
    %c1_124 = arith.constant 1 : index
    %225 = memref.load %arg2[%c7_123, %c1_124] : memref<8x3xf32, #tpu.memory_space<smem>>
    %226 = vector.broadcast %225 : f32 to vector<18x18xf32>
    %227 = arith.mulf %121, %226 : vector<18x18xf32>
    %228 = arith.addf %224, %227 : vector<18x18xf32>
    %c7_125 = arith.constant 7 : index
    %c2_126 = arith.constant 2 : index
    %229 = memref.load %arg2[%c7_125, %c2_126] : memref<8x3xf32, #tpu.memory_space<smem>>
    %230 = vector.broadcast %229 : f32 to vector<18x18xf32>
    %231 = arith.mulf %123, %230 : vector<18x18xf32>
    %232 = arith.addf %228, %231 : vector<18x18xf32>
    %c7_127 = arith.constant 7 : index
    %233 = memref.load %arg3[%c7_127] : memref<8xf32, #tpu.memory_space<smem>>
    %234 = vector.broadcast %233 : f32 to vector<18x18xf32>
    %235 = arith.addf %232, %234 : vector<18x18xf32>
    %236 = vector.shape_cast %19 : vector<18x18xf32> to vector<1x18x18xf32>
    %237 = vector.shape_cast %33 : vector<18x18xf32> to vector<1x18x18xf32>
    %238 = vector.shape_cast %47 : vector<18x18xf32> to vector<1x18x18xf32>
    %239 = vector.shape_cast %61 : vector<18x18xf32> to vector<1x18x18xf32>
    %240 = vector.shape_cast %75 : vector<18x18xf32> to vector<1x18x18xf32>
    %241 = vector.shape_cast %89 : vector<18x18xf32> to vector<1x18x18xf32>
    %242 = vector.shape_cast %103 : vector<18x18xf32> to vector<1x18x18xf32>
    %243 = vector.shape_cast %117 : vector<18x18xf32> to vector<1x18x18xf32>
    %244 = vector.shape_cast %137 : vector<18x18xf32> to vector<1x18x18xf32>
    %245 = vector.shape_cast %151 : vector<18x18xf32> to vector<1x18x18xf32>
    %246 = vector.shape_cast %165 : vector<18x18xf32> to vector<1x18x18xf32>
    %247 = vector.shape_cast %179 : vector<18x18xf32> to vector<1x18x18xf32>
    %248 = vector.shape_cast %193 : vector<18x18xf32> to vector<1x18x18xf32>
    %249 = vector.shape_cast %207 : vector<18x18xf32> to vector<1x18x18xf32>
    %250 = vector.shape_cast %221 : vector<18x18xf32> to vector<1x18x18xf32>
    %251 = vector.shape_cast %235 : vector<18x18xf32> to vector<1x18x18xf32>
    %252 = tpu.concatenate %236, %237, %238, %239, %240, %241, %242, %243, %244, %245, %246, %247, %248, %249, %250, %251 in 0 : vector<1x18x18xf32>, vector<1x18x18xf32>, vector<1x18x18xf32>, vector<1x18x18xf32>, vector<1x18x18xf32>, vector<1x18x18xf32>, vector<1x18x18xf32>, vector<1x18x18xf32>, vector<1x18x18xf32>, vector<1x18x18xf32>, vector<1x18x18xf32>, vector<1x18x18xf32>, vector<1x18x18xf32>, vector<1x18x18xf32>, vector<1x18x18xf32>, vector<1x18x18xf32> -> vector<16x18x18xf32>
    %253 = arith.truncf %252 : vector<16x18x18xf32> to vector<16x18x18xbf16>
    "tpu.trace_start"() <{level = 10 : i32, message = "gqd,gkd->gqk"}> : () -> ()
    %cst = arith.constant dense<0.000000e+00> : vector<16x18x18xf32>
    %254 = tpu.matmul %253, %253, %cst {dimension_numbers = #tpu.dot_dimension_numbers<[2], [2], [1], [1], [0, 0, 0, 1, 1, 1], [0], [0]>} : vector<16x18x18xbf16>, vector<16x18x18xbf16>, vector<16x18x18xf32> -> vector<16x18x18xf32>
    "tpu.trace_stop"() : () -> ()
    %cst_128 = arith.constant 0.353553385 : f32
    %255 = vector.broadcast %cst_128 : f32 to vector<16x18x18xf32>
    %256 = arith.mulf %254, %255 : vector<16x18x18xf32>
    %cst_129 = arith.constant dense<0xFF800000> : vector<16x18xf32>
    %257 = vector.multi_reduction <maximumf>, %256, %cst_129 [2] : vector<16x18x18xf32> to vector<16x18xf32>
    %258 = vector.shape_cast %257 : vector<16x18xf32> to vector<16x18x1xf32>
    %259 = vector.broadcast %258 : vector<16x18x1xf32> to vector<16x18x18xf32>
    %260 = arith.subf %256, %259 : vector<16x18x18xf32>
    %261 = math.exp %260 : vector<16x18x18xf32>
    %cst_130 = arith.constant dense<0.000000e+00> : vector<16x18xf32>
    %262 = vector.multi_reduction <add>, %261, %cst_130 [2] : vector<16x18x18xf32> to vector<16x18xf32>
    %263 = vector.shape_cast %262 : vector<16x18xf32> to vector<16x18x1xf32>
    %264 = tpu.reciprocal %263 {approx = true} : vector<16x18x1xf32> -> vector<16x18x1xf32>
    %265 = vector.broadcast %264 : vector<16x18x1xf32> to vector<16x18x18xf32>
    %266 = arith.mulf %261, %265 : vector<16x18x18xf32>
    %267 = arith.truncf %266 : vector<16x18x18xf32> to vector<16x18x18xbf16>
    "tpu.trace_start"() <{level = 10 : i32, message = "gqk,gkd->gqd"}> : () -> ()
    %cst_131 = arith.constant dense<0.000000e+00> : vector<16x18x18xf32>
    %268 = tpu.matmul %267, %253, %cst_131 {dimension_numbers = #tpu.dot_dimension_numbers<[2], [1], [1], [2], [0, 0, 0, 1, 1, 2], [0], [0]>} : vector<16x18x18xbf16>, vector<16x18x18xbf16>, vector<16x18x18xf32> -> vector<16x18x18xf32>
    "tpu.trace_stop"() : () -> ()
    %269 = vector.shape_cast %268 : vector<16x18x18xf32> to vector<2x8x18x18xf32>
    %c0_132 = arith.constant 0 : index
    %c0_133 = arith.constant 0 : index
    %c0_134 = arith.constant 0 : index
    %c0_135 = arith.constant 0 : index
    %270 = vector.load %arg4[%c0_132, %c0_133, %c0_134, %c0_135] : memref<2x8x18x18xf32, #tpu.memory_space<vmem>>, vector<2x8x18x18xf32>
    tpu.vector_store %arg4[%c0_132, %c0_133, %c0_134, %c0_135], %269 {strides = array<i32>} : memref<2x8x18x18xf32, #tpu.memory_space<vmem>>, vector<2x8x18x18xf32>,
    return
  }
  func.func @transform_0(%arg0: i32) -> (i32, i32, i32, i32) {
    %c0_i32 = arith.constant 0 : i32
    %c0_i32_0 = arith.constant 0 : i32
    %c0_i32_1 = arith.constant 0 : i32
    %c0_i32_2 = arith.constant 0 : i32
    return %arg0, %c0_i32, %c0_i32_0, %c0_i32_1 : i32, i32, i32, i32
  }
  func.func @transform_1(%arg0: i32) -> (i32, i32) {
    %c0_i32 = arith.constant 0 : i32
    %c0_i32_0 = arith.constant 0 : i32
    %c0_i32_1 = arith.constant 0 : i32
    return %c0_i32, %c0_i32_0 : i32, i32
  }
  func.func @transform_2(%arg0: i32) -> i32 {
    %c0_i32 = arith.constant 0 : i32
    %c0_i32_0 = arith.constant 0 : i32
    return %c0_i32 : i32
  }
  func.func @transform_3(%arg0: i32) -> (i32, i32, i32, i32) {
    %c0_i32 = arith.constant 0 : i32
    %c0_i32_0 = arith.constant 0 : i32
    %c0_i32_1 = arith.constant 0 : i32
    %c0_i32_2 = arith.constant 0 : i32
    return %arg0, %c0_i32, %c0_i32_0, %c0_i32_1 : i32, i32, i32, i32
  }
}

</mosaic_0001>

<llo_original>
// kernel: tpu_custom_call.1
$region0: #{tpu_custom_call.1}
  #allocation0 [shape = 'u32[]', space=smem, size = 0x4, offset = 0x4, fixed_abs, tag = 'smem constant byte address 0x4 - core index']
  #allocation1 [shape = 'u32[72,128]{1,0:T(1,128)}', space=vmem, size = 0x9000, scoped, tag = 'internal scratch']
  %s0 = inlined_call_operand.vmem [shape: f32[4,3,18,18], index: 0, kind: input, shape index: {}]
  %s1 = inlined_call_operand.vmem [shape: f32[8,3], index: 1, kind: input, shape index: {}]
  %s2 = inlined_call_operand.vmem [shape: f32[8], index: 2, kind: input, shape index: {}]
  %s3 = inlined_call_operand.vmem [shape: f32[4,8,18,18], index: 3, kind: output, shape index: {}]
  %s4 = sld [smem:[#allocation0]]
  $region53: #{tpu_custom_call.1} parent=0
    _
  %s6 = ssub.s32 1, %s4
  %s7 = scalar_select 0, %s6, %s4
  $region1: #{tpu_custom_call.1} parent=0
    #allocation2 [shape = 'u8[4096]{0}', space=smem, size = 0x1000, scoped, tag = 'input window, operand 1, single buffered']
    #allocation3 [shape = 's32[2]{0}', space=sflag, size = 0x8, scoped, tag = 'scoped memory for tpu_custom_call.1']
    #allocation4 [shape = 'u8[512]{0}', space=smem, size = 0x200, scoped, tag = 'input window, operand 2, single buffered']
    #allocation5 [shape = 's32[1]{0}', space=sflag, size = 0x4, scoped, tag = 'scoped memory for tpu_custom_call.1']
    %8 = vsyncpa [#allocation3], 0
    %9 = vsyncpa [#allocation5], 0
    loop: start=0, step=1, limit=4
    $region2: #{tpu_custom_call.1} parent=1 // loop_pre_header
      _
    $region3: #{tpu_custom_call.1} parent=1 // loop_header
      %s11 = sphi 0, %s15
      %p12 = scmp.ge.s32.totalorder %s11, 4
      %s21 = sphi 0, %s23
      %s24 = sphi 0, %s21
      %s25 = sphi 0, %s24
      %s41 = sphi 0, %s25
      %s45 = sphi 0, %s45
      %s47 = sphi 0, %s45
      %s48 = sphi 0, %s47
      %s62 = sphi 0, %s48
      %s66 = sphi 0, %s66
      %s68 = sphi 0, %s66
      %s69 = sphi 0, %s68
      %s83 = sphi 0, %s69
      %s89 = sphi 0, %s91
      %s92 = sphi 0, %s89
      %s93 = sphi 0, %s92
      %s109 = sphi 0, %s93
    $region4: #{tpu_custom_call.1} parent=1 // loop_header_branch
      %14 = sbr.rel (%p12) target = $region8
    $region5: #{tpu_custom_call.1} parent=1 // loop_body
      %s16 = ssub.s32 %s11, 1
      %s17 = ssub.s32 %s11, 2
      %s18 = sadd.s32 %s11, 1
      %s19 = ssub.s32 %s11, %s18
      %p20 = scmp.eq.s32.totalorder %s19, 0
      %s22 = sadd.s32 %s21, 1
      %s23 = scalar_select %p20, %s21, %s22
      %p26 = pneg %p20
      %p27 = scmp.eq.s32.totalorder %s11, 1
      %p28 = por %p26, %p27
      %p29 = scmp.ne.s32.totalorder %s21, %s24
      %p30 = scmp.eq.s32.totalorder %s11, 0
      %p31 = por %p29, %p30
      %p32 = scmp.ne.s32.totalorder %s21, %s24
      %p33 = scmp.eq.s32.totalorder %s16, 1
      %p34 = por %p32, %p33
      %p35 = scmp.ne.s32.totalorder %s24, %s25
      %p36 = scmp.eq.s32.totalorder %s16, 0
      %p37 = por %p35, %p36
      %p38 = scmp.ne.s32.totalorder %s24, %s25
      %p39 = scmp.eq.s32.totalorder %s17, 1
      %p40 = por %p38, %p39
      %p42 = scmp.ne.s32.totalorder %s25, %s41
      %p43 = scmp.eq.s32.totalorder %s17, 0
      %p44 = por %p42, %p43
      %s46 = sadd.s32 %s45, 1
      %p49 = scmp.eq.s32.totalorder %s11, 1
      %p50 = scmp.ne.s32.totalorder %s45, %s47
      %p51 = scmp.eq.s32.totalorder %s11, 0
      %p52 = por %p50, %p51
      %p53 = scmp.ne.s32.totalorder %s45, %s47
      %p54 = scmp.eq.s32.totalorder %s16, 1
      %p55 = por %p53, %p54
      %p56 = scmp.ne.s32.totalorder %s47, %s48
      %p57 = scmp.eq.s32.totalorder %s16, 0
      %p58 = por %p56, %p57
      %p59 = scmp.ne.s32.totalorder %s47, %s48
      %p60 = scmp.eq.s32.totalorder %s17, 1
      %p61 = por %p59, %p60
      %p63 = scmp.ne.s32.totalorder %s48, %s62
      %p64 = scmp.eq.s32.totalorder %s17, 0
      %p65 = por %p63, %p64
      %s67 = sadd.s32 %s66, 1
      %p70 = scmp.eq.s32.totalorder %s11, 1
      %p71 = scmp.ne.s32.totalorder %s66, %s68
      %p72 = scmp.eq.s32.totalorder %s11, 0
      %p73 = por %p71, %p72
      %p74 = scmp.ne.s32.totalorder %s66, %s68
      %p75 = scmp.eq.s32.totalorder %s16, 1
      %p76 = por %p74, %p75
      %p77 = scmp.ne.s32.totalorder %s68, %s69
      %p78 = scmp.eq.s32.totalorder %s16, 0
      %p79 = por %p77, %p78
      %p80 = scmp.ne.s32.totalorder %s68, %s69
      %p81 = scmp.eq.s32.totalorder %s17, 1
      %p82 = por %p80, %p81
      %p84 = scmp.ne.s32.totalorder %s69, %s83
      %p85 = scmp.eq.s32.totalorder %s17, 0
      %p86 = por %p84, %p85
      %s87 = ssub.s32 %s11, %s18
      %p88 = scmp.eq.s32.totalorder %s87, 0
      %s90 = sadd.s32 %s89, 1
      %s91 = scalar_select %p88, %s89, %s90
      %p94 = pneg %p88
      %p95 = scmp.eq.s32.totalorder %s11, 1
      %p96 = por %p94, %p95
      %p97 = scmp.ne.s32.totalorder %s89, %s92
      %p98 = scmp.eq.s32.totalorder %s11, 0
      %p99 = por %p97, %p98
      %p100 = scmp.ne.s32.totalorder %s89, %s92
      %p101 = scmp.eq.s32.totalorder %s16, 1
      %p102 = por %p100, %p101
      %p103 = scmp.ne.s32.totalorder %s92, %s93
      %p104 = scmp.eq.s32.totalorder %s16, 0
      %p105 = por %p103, %p104
      %p106 = scmp.ne.s32.totalorder %s92, %s93
      %p107 = scmp.eq.s32.totalorder %s17, 1
      %p108 = por %p106, %p107
      %p110 = scmp.ne.s32.totalorder %s93, %s109
      %p111 = scmp.eq.s32.totalorder %s17, 0
      %p112 = por %p110, %p111
      %p113 = scmp.le.s32.totalorder 1, %s11
      %p114 = scmp.lt.s32.totalorder %s11, 3
      %p115 = pnand %p113, %p114
      %p116 = pneg %p115
      // Predicated region
      $region9: #{tpu_custom_call.1} parent=5 // pred_check
        _
      $region10: #{tpu_custom_call.1} parent=5 // pred_check_branch
        %118 = sbr.rel (%p115) target = $region12
      $region11: #{tpu_custom_call.1} parent=5 // pred_region
        %s119 = ssub.s32 %s11, 1
        // Predicated region
        $region13: #{tpu_custom_call.1} parent=11 // pred_check
          %p120 = pneg %p58
        $region14: #{tpu_custom_call.1} parent=11 // pred_check_branch
          %122 = sbr.rel (%p120) target = $region16
        $region15: #{tpu_custom_call.1} parent=11 // pred_region
          %124 = vsyncadd [#allocation3], 0
          %s126 = sshll.u32 %s1, 4
          %s127 = int_to_ptr.vmem [resolvable:$true] %s126
          %129 = dma.vmem_to_smem %s127, 128, [#allocation2], [#allocation3]
        $region16: #{tpu_custom_call.1} parent=11 // pred_fallthru
          _
        // Predicated region
        $region17: #{tpu_custom_call.1} parent=11 // pred_check
          %p130 = pneg %p79
        $region18: #{tpu_custom_call.1} parent=11 // pred_check_branch
          %132 = sbr.rel (%p130) target = $region20
        $region19: #{tpu_custom_call.1} parent=11 // pred_region
          %134 = vsyncadd [#allocation5], 0
          %s136 = sshll.u32 %s2, 4
          %s137 = int_to_ptr.vmem [resolvable:$true] %s136
          %139 = dma.vmem_to_smem %s137, 16, [#allocation4], [#allocation5]
        $region20: #{tpu_custom_call.1} parent=11 // pred_fallthru
          _
      $region12: #{tpu_custom_call.1} parent=5 // pred_fallthru
        _
      %p140 = scmp.lt.s32.totalorder %s11, 2
      // Predicated region
      $region21: #{tpu_custom_call.1} parent=5 // pred_check
        %p141 = pneg %p140
      $region22: #{tpu_custom_call.1} parent=5 // pred_check_branch
        %143 = sbr.rel (%p141) target = $region24
      $region23: #{tpu_custom_call.1} parent=5 // pred_region
        // Predicated region
        $region25: #{tpu_custom_call.1} parent=23 // pred_check
          %p144 = pneg %p31
        $region26: #{tpu_custom_call.1} parent=23 // pred_check_branch
          %146 = sbr.rel (%p144) target = $region28
        $region27: #{tpu_custom_call.1} parent=23 // pred_region
          %s147 = smul.u32 2, %s11
          %p148 = scmp.lt.s32.totalorder %s147, 3
          %s149 = scalar_select %p148, %s147, 3
          %s150 = smul.addr %s149, 9
          %s151 = smul.addr %s150, 8
          %s152 = scalar_lea.vmem %s0, %s151
          %s153 = smul.u32 2, %s11
        $region28: #{tpu_custom_call.1} parent=23 // pred_fallthru
          _
      $region24: #{tpu_custom_call.1} parent=5 // pred_fallthru
        _
      %p154 = scmp.le.s32.totalorder 1, %s11
      %p155 = scmp.lt.s32.totalorder %s11, 3
      %p156 = pnand %p154, %p155
      %p157 = pneg %p156
      // Predicated region
      $region29: #{tpu_custom_call.1} parent=5 // pred_check
        _
      $region30: #{tpu_custom_call.1} parent=5 // pred_check_branch
        %159 = sbr.rel (%p156) target = $region32
      $region31: #{tpu_custom_call.1} parent=5 // pred_region
        %s160 = ssub.s32 %s11, 1
        // Predicated region
        $region33: #{tpu_custom_call.1} parent=31 // pred_check
          %p161 = pneg %p58
        $region34: #{tpu_custom_call.1} parent=31 // pred_check_branch
          %163 = sbr.rel (%p161) target = $region36
        $region35: #{tpu_custom_call.1} parent=31 // pred_region
          %165 = dma.done [#allocation3], 128
        $region36: #{tpu_custom_call.1} parent=31 // pred_fallthru
          _
        // Predicated region
        $region37: #{tpu_custom_call.1} parent=31 // pred_check
          %p166 = pneg %p79
        $region38: #{tpu_custom_call.1} parent=31 // pred_check_branch
          %168 = sbr.rel (%p166) target = $region40
        $region39: #{tpu_custom_call.1} parent=31 // pred_region
          %170 = dma.done [#allocation5], 16
        $region40: #{tpu_custom_call.1} parent=31 // pred_fallthru
          _
        %171 = sfence
        %s172 = smul.u32 2, %s16
        %p173 = scmp.lt.s32.totalorder %s172, 3
        %s174 = scalar_select %p173, %s172, 3
        %s175 = smul.addr %s174, 9
        %s176 = smul.addr %s175, 8
        %s177 = scalar_lea.vmem %s0, %s176
        %p178 = pneg %p37
        %p179 = pneg %p34
        %p180 = pneg %p58
        %p181 = pneg %p55
        %p182 = pneg %p79
        %p183 = pneg %p76
        %p184 = pneg %p105
        %p185 = pneg %p102
        %s186 = smul.u32 2, %s16
        %p187 = scmp.lt.s32.totalorder %s186, 3
        %s188 = scalar_select %p187, %s186, 3
        %s189 = smul.addr %s188, 24
        %s190 = smul.addr %s189, 8
        %s191 = scalar_lea.vmem %s3, %s190
        %s192 = smul.u32 2, %s16
        %p193 = scmp.lt.s32.totalorder %s192, 3
        %s194 = scalar_select %p193, %s192, 3
        %s195 = smul.addr %s194, 9
        %s196 = smul.addr %s195, 8
        %s197 = scalar_lea.vmem %s0, %s196
        %s198 = smul.u32 2, %s16
        %s199 = smul.u32 2, %s16
        %p200 = scmp.lt.s32.totalorder %s199, 3
        %s201 = scalar_select %p200, %s199, 3
        %s202 = smul.addr %s201, 24
        %s203 = smul.addr %s202, 8
        %s204 = scalar_lea.vmem %s3, %s203
        %s205 = smul.u32 2, %s16
        %v207 = vld [vmem:[%s197] sm:$0xff]
        %v208 = vld [vmem:[%s197 + $0x8] sm:$0xff]
        %v209 = vld [vmem:[%s197 + $0x10] sm:$0x3]
        %s210 = scalar_lea.vmem %s197, 24
        %v211 = vld [vmem:[%s210] sm:$0xff]
        %v212 = vld [vmem:[%s210 + $0x8] sm:$0xff]
        %v213 = vld [vmem:[%s210 + $0x10] sm:$0x3]
        %s214 = scalar_lea.vmem %s197, 48
        %v215 = vld [vmem:[%s214] sm:$0xff]
        %v216 = vld [vmem:[%s214 + $0x8] sm:$0xff]
        %v217 = vld [vmem:[%s214 + $0x10] sm:$0x3]
        %s218 = sld [smem:[#allocation2]]
        %v219 = vstv %s218
        %v220 = vmul.f32 %v207, %v219
        %v221 = vmul.f32 %v208, %v219
        %v222 = vmul.f32 %v209, %v219
        %s223 = sld [smem:[#allocation2 + $0x1]]
        %v224 = vstv %s223
        %v225 = vmul.f32 %v211, %v224
        %v226 = vmul.f32 %v212, %v224
        %v227 = vmul.f32 %v213, %v224
        %v228 = vadd.f32 %v220, %v225
        %v229 = vadd.f32 %v221, %v226
        %v230 = vadd.f32 %v222, %v227
        %s231 = sld [smem:[#allocation2 + $0x2]]
        %v232 = vstv %s231
        %v233 = vmul.f32 %v215, %v232
        %v234 = vmul.f32 %v216, %v232
        %v235 = vmul.f32 %v217, %v232
        %v236 = vadd.f32 %v228, %v233
        %v237 = vadd.f32 %v229, %v234
        %v238 = vadd.f32 %v230, %v235
        %s239 = sld [smem:[#allocation4]]
        %v240 = vstv %s239
        %v241 = vadd.f32 %v236, %v240
        %v242 = vadd.f32 %v237, %v240
        %v243 = vadd.f32 %v238, %v240
        %s244 = sld [smem:[#allocation2 + $0x80]]
        %v245 = vstv %s244
        %v246 = vmul.f32 %v207, %v245
        %v247 = vmul.f32 %v208, %v245
        %v248 = vmul.f32 %v209, %v245
        %s249 = sld [smem:[#allocation2 + $0x81]]
        %v250 = vstv %s249
        %v251 = vmul.f32 %v211, %v250
        %v252 = vmul.f32 %v212, %v250
        %v253 = vmul.f32 %v213, %v250
        %v254 = vadd.f32 %v246, %v251
        %v255 = vadd.f32 %v247, %v252
        %v256 = vadd.f32 %v248, %v253
        %s257 = sld [smem:[#allocation2 + $0x82]]
        %v258 = vstv %s257
        %v259 = vmul.f32 %v215, %v258
        %v260 = vmul.f32 %v216, %v258
        %v261 = vmul.f32 %v217, %v258
        %v262 = vadd.f32 %v254, %v259
        %v263 = vadd.f32 %v255, %v260
        %v264 = vadd.f32 %v256, %v261
        %s265 = sld [smem:[#allocation4 + $0x1]]
        %v266 = vstv %s265
        %v267 = vadd.f32 %v262, %v266
        %v268 = vadd.f32 %v263, %v266
        %v269 = vadd.f32 %v264, %v266
        %s270 = sld [smem:[#allocation2 + $0x100]]
        %v271 = vstv %s270
        %v272 = vmul.f32 %v207, %v271
        %v273 = vmul.f32 %v208, %v271
        %v274 = vmul.f32 %v209, %v271
        %s275 = sld [smem:[#allocation2 + $0x101]]
        %v276 = vstv %s275
        %v277 = vmul.f32 %v211, %v276
        %v278 = vmul.f32 %v212, %v276
        %v279 = vmul.f32 %v213, %v276
        %v280 = vadd.f32 %v272, %v277
        %v281 = vadd.f32 %v273, %v278
        %v282 = vadd.f32 %v274, %v279
        %s283 = sld [smem:[#allocation2 + $0x102]]
        %v284 = vstv %s283
        %v285 = vmul.f32 %v215, %v284
        %v286 = vmul.f32 %v216, %v284
        %v287 = vmul.f32 %v217, %v284
        %v288 = vadd.f32 %v280, %v285
        %v289 = vadd.f32 %v281, %v286
        %v290 = vadd.f32 %v282, %v287
        %s291 = sld [smem:[#allocation4 + $0x2]]
        %v292 = vstv %s291
        %v293 = vadd.f32 %v288, %v292
        %v294 = vadd.f32 %v289, %v292
        %v295 = vadd.f32 %v290, %v292
        %s296 = sld [smem:[#allocation2 + $0x180]]
        %v297 = vstv %s296
        %v298 = vmul.f32 %v207, %v297
        %v299 = vmul.f32 %v208, %v297
        %v300 = vmul.f32 %v209, %v297
        %s301 = sld [smem:[#allocation2 + $0x181]]
        %v302 = vstv %s301
        %v303 = vmul.f32 %v211, %v302
        %v304 = vmul.f32 %v212, %v302
        %v305 = vmul.f32 %v213, %v302
        %v306 = vadd.f32 %v298, %v303
        %v307 = vadd.f32 %v299, %v304
        %v308 = vadd.f32 %v300, %v305
        %s309 = sld [smem:[#allocation2 + $0x182]]
        %v310 = vstv %s309
        %v311 = vmul.f32 %v215, %v310
        %v312 = vmul.f32 %v216, %v310
        %v313 = vmul.f32 %v217, %v310
        %v314 = vadd.f32 %v306, %v311
        %v315 = vadd.f32 %v307, %v312
        %v316 = vadd.f32 %v308, %v313
        %s317 = sld [smem:[#allocation4 + $0x3]]
        %v318 = vstv %s317
        %v319 = vadd.f32 %v314, %v318
        %v320 = vadd.f32 %v315, %v318
        %v321 = vadd.f32 %v316, %v318
        %s322 = sld [smem:[#allocation2 + $0x200]]
        %v323 = vstv %s322
        %v324 = vmul.f32 %v207, %v323
        %v325 = vmul.f32 %v208, %v323
        %v326 = vmul.f32 %v209, %v323
        %s327 = sld [smem:[#allocation2 + $0x201]]
        %v328 = vstv %s327
        %v329 = vmul.f32 %v211, %v328
        %v330 = vmul.f32 %v212, %v328
        %v331 = vmul.f32 %v213, %v328
        %v332 = vadd.f32 %v324, %v329
        %v333 = vadd.f32 %v325, %v330
        %v334 = vadd.f32 %v326, %v331
        %s335 = sld [smem:[#allocation2 + $0x202]]
        %v336 = vstv %s335
        %v337 = vmul.f32 %v215, %v336
        %v338 = vmul.f32 %v216, %v336
        %v339 = vmul.f32 %v217, %v336
        %v340 = vadd.f32 %v332, %v337
        %v341 = vadd.f32 %v333, %v338
        %v342 = vadd.f32 %v334, %v339
        %s343 = sld [smem:[#allocation4 + $0x4]]
        %v344 = vstv %s343
        %v345 = vadd.f32 %v340, %v344
        %v346 = vadd.f32 %v341, %v344
        %v347 = vadd.f32 %v342, %v344
        %s348 = sld [smem:[#allocation2 + $0x280]]
        %v349 = vstv %s348
        %v350 = vmul.f32 %v207, %v349
        %v351 = vmul.f32 %v208, %v349
        %v352 = vmul.f32 %v209, %v349
        %s353 = sld [smem:[#allocation2 + $0x281]]
        %v354 = vstv %s353
        %v355 = vmul.f32 %v211, %v354
        %v356 = vmul.f32 %v212, %v354
        %v357 = vmul.f32 %v213, %v354
        %v358 = vadd.f32 %v350, %v355
        %v359 = vadd.f32 %v351, %v356
        %v360 = vadd.f32 %v352, %v357
        %s361 = sld [smem:[#allocation2 + $0x282]]
        %v362 = vstv %s361
        %v363 = vmul.f32 %v215, %v362
        %v364 = vmul.f32 %v216, %v362
        %v365 = vmul.f32 %v217, %v362
        %v366 = vadd.f32 %v358, %v363
        %v367 = vadd.f32 %v359, %v364
        %v368 = vadd.f32 %v360, %v365
        %s369 = sld [smem:[#allocation4 + $0x5]]
        %v370 = vstv %s369
        %v371 = vadd.f32 %v366, %v370
        %v372 = vadd.f32 %v367, %v370
        %v373 = vadd.f32 %v368, %v370
        %s374 = sld [smem:[#allocation2 + $0x300]]
        %v375 = vstv %s374
        %v376 = vmul.f32 %v207, %v375
        %v377 = vmul.f32 %v208, %v375
        %v378 = vmul.f32 %v209, %v375
        %s379 = sld [smem:[#allocation2 + $0x301]]
        %v380 = vstv %s379
        %v381 = vmul.f32 %v211, %v380
        %v382 = vmul.f32 %v212, %v380
        %v383 = vmul.f32 %v213, %v380
        %v384 = vadd.f32 %v376, %v381
        %v385 = vadd.f32 %v377, %v382
        %v386 = vadd.f32 %v378, %v383
        %s387 = sld [smem:[#allocation2 + $0x302]]
        %v388 = vstv %s387
        %v389 = vmul.f32 %v215, %v388
        %v390 = vmul.f32 %v216, %v388
        %v391 = vmul.f32 %v217, %v388
        %v392 = vadd.f32 %v384, %v389
        %v393 = vadd.f32 %v385, %v390
        %v394 = vadd.f32 %v386, %v391
        %s395 = sld [smem:[#allocation4 + $0x6]]
        %v396 = vstv %s395
        %v397 = vadd.f32 %v392, %v396
        %v398 = vadd.f32 %v393, %v396
        %v399 = vadd.f32 %v394, %v396
        %s400 = sld [smem:[#allocation2 + $0x380]]
        %v401 = vstv %s400
        %v402 = vmul.f32 %v207, %v401
        %v403 = vmul.f32 %v208, %v401
        %v404 = vmul.f32 %v209, %v401
        %s405 = sld [smem:[#allocation2 + $0x381]]
        %v406 = vstv %s405
        %v407 = vmul.f32 %v211, %v406
        %v408 = vmul.f32 %v212, %v406
        %v409 = vmul.f32 %v213, %v406
        %v410 = vadd.f32 %v402, %v407
        %v411 = vadd.f32 %v403, %v408
        %v412 = vadd.f32 %v404, %v409
        %s413 = sld [smem:[#allocation2 + $0x382]]
        %v414 = vstv %s413
        %v415 = vmul.f32 %v215, %v414
        %v416 = vmul.f32 %v216, %v414
        %v417 = vmul.f32 %v217, %v414
        %v418 = vadd.f32 %v410, %v415
        %v419 = vadd.f32 %v411, %v416
        %v420 = vadd.f32 %v412, %v417
        %s421 = sld [smem:[#allocation4 + $0x7]]
        %v422 = vstv %s421
        %v423 = vadd.f32 %v418, %v422
        %v424 = vadd.f32 %v419, %v422
        %v425 = vadd.f32 %v420, %v422
        %s426 = scalar_lea.vmem %s197, 72
        %v427 = vld [vmem:[%s426] sm:$0xff]
        %v428 = vld [vmem:[%s426 + $0x8] sm:$0xff]
        %v429 = vld [vmem:[%s426 + $0x10] sm:$0x3]
        %s430 = scalar_lea.vmem %s197, 96
        %v431 = vld [vmem:[%s430] sm:$0xff]
        %v432 = vld [vmem:[%s430 + $0x8] sm:$0xff]
        %v433 = vld [vmem:[%s430 + $0x10] sm:$0x3]
        %s434 = scalar_lea.vmem %s197, 120
        %v435 = vld [vmem:[%s434] sm:$0xff]
        %v436 = vld [vmem:[%s434 + $0x8] sm:$0xff]
        %v437 = vld [vmem:[%s434 + $0x10] sm:$0x3]
        %v438 = vmul.f32 %v427, %v219
        %v439 = vmul.f32 %v428, %v219
        %v440 = vmul.f32 %v429, %v219
        %v441 = vmul.f32 %v431, %v224
        %v442 = vmul.f32 %v432, %v224
        %v443 = vmul.f32 %v433, %v224
        %v444 = vadd.f32 %v438, %v441
        %v445 = vadd.f32 %v439, %v442
        %v446 = vadd.f32 %v440, %v443
        %v447 = vmul.f32 %v435, %v232
        %v448 = vmul.f32 %v436, %v232
        %v449 = vmul.f32 %v437, %v232
        %v450 = vadd.f32 %v444, %v447
        %v451 = vadd.f32 %v445, %v448
        %v452 = vadd.f32 %v446, %v449
        %v453 = vadd.f32 %v450, %v240
        %v454 = vadd.f32 %v451, %v240
        %v455 = vadd.f32 %v452, %v240
        %v456 = vmul.f32 %v427, %v245
        %v457 = vmul.f32 %v428, %v245
        %v458 = vmul.f32 %v429, %v245
        %v459 = vmul.f32 %v431, %v250
        %v460 = vmul.f32 %v432, %v250
        %v461 = vmul.f32 %v433, %v250
        %v462 = vadd.f32 %v456, %v459
        %v463 = vadd.f32 %v457, %v460
        %v464 = vadd.f32 %v458, %v461
        %v465 = vmul.f32 %v435, %v258
        %v466 = vmul.f32 %v436, %v258
        %v467 = vmul.f32 %v437, %v258
        %v468 = vadd.f32 %v462, %v465
        %v469 = vadd.f32 %v463, %v466
        %v470 = vadd.f32 %v464, %v467
        %v471 = vadd.f32 %v468, %v266
        %v472 = vadd.f32 %v469, %v266
        %v473 = vadd.f32 %v470, %v266
        %v474 = vmul.f32 %v427, %v271
        %v475 = vmul.f32 %v428, %v271
        %v476 = vmul.f32 %v429, %v271
        %v477 = vmul.f32 %v431, %v276
        %v478 = vmul.f32 %v432, %v276
        %v479 = vmul.f32 %v433, %v276
        %v480 = vadd.f32 %v474, %v477
        %v481 = vadd.f32 %v475, %v478
        %v482 = vadd.f32 %v476, %v479
        %v483 = vmul.f32 %v435, %v284
        %v484 = vmul.f32 %v436, %v284
        %v485 = vmul.f32 %v437, %v284
        %v486 = vadd.f32 %v480, %v483
        %v487 = vadd.f32 %v481, %v484
        %v488 = vadd.f32 %v482, %v485
        %v489 = vadd.f32 %v486, %v292
        %v490 = vadd.f32 %v487, %v292
        %v491 = vadd.f32 %v488, %v292
        %v492 = vmul.f32 %v427, %v297
        %v493 = vmul.f32 %v428, %v297
        %v494 = vmul.f32 %v429, %v297
        %v495 = vmul.f32 %v431, %v302
        %v496 = vmul.f32 %v432, %v302
        %v497 = vmul.f32 %v433, %v302
        %v498 = vadd.f32 %v492, %v495
        %v499 = vadd.f32 %v493, %v496
        %v500 = vadd.f32 %v494, %v497
        %v501 = vmul.f32 %v435, %v310
        %v502 = vmul.f32 %v436, %v310
        %v503 = vmul.f32 %v437, %v310
        %v504 = vadd.f32 %v498, %v501
        %v505 = vadd.f32 %v499, %v502
        %v506 = vadd.f32 %v500, %v503
        %v507 = vadd.f32 %v504, %v318
        %v508 = vadd.f32 %v505, %v318
        %v509 = vadd.f32 %v506, %v318
        %v510 = vmul.f32 %v427, %v323
        %v511 = vmul.f32 %v428, %v323
        %v512 = vmul.f32 %v429, %v323
        %v513 = vmul.f32 %v431, %v328
        %v514 = vmul.f32 %v432, %v328
        %v515 = vmul.f32 %v433, %v328
        %v516 = vadd.f32 %v510, %v513
        %v517 = vadd.f32 %v511, %v514
        %v518 = vadd.f32 %v512, %v515
        %v519 = vmul.f32 %v435, %v336
        %v520 = vmul.f32 %v436, %v336
        %v521 = vmul.f32 %v437, %v336
        %v522 = vadd.f32 %v516, %v519
        %v523 = vadd.f32 %v517, %v520
        %v524 = vadd.f32 %v518, %v521
        %v525 = vadd.f32 %v522, %v344
        %v526 = vadd.f32 %v523, %v344
        %v527 = vadd.f32 %v524, %v344
        %v528 = vmul.f32 %v427, %v349
        %v529 = vmul.f32 %v428, %v349
        %v530 = vmul.f32 %v429, %v349
        %v531 = vmul.f32 %v431, %v354
        %v532 = vmul.f32 %v432, %v354
        %v533 = vmul.f32 %v433, %v354
        %v534 = vadd.f32 %v528, %v531
        %v535 = vadd.f32 %v529, %v532
        %v536 = vadd.f32 %v530, %v533
        %v537 = vmul.f32 %v435, %v362
        %v538 = vmul.f32 %v436, %v362
        %v539 = vmul.f32 %v437, %v362
        %v540 = vadd.f32 %v534, %v537
        %v541 = vadd.f32 %v535, %v538
        %v542 = vadd.f32 %v536, %v539
        %v543 = vadd.f32 %v540, %v370
        %v544 = vadd.f32 %v541, %v370
        %v545 = vadd.f32 %v542, %v370
        %v546 = vmul.f32 %v427, %v375
        %v547 = vmul.f32 %v428, %v375
        %v548 = vmul.f32 %v429, %v375
        %v549 = vmul.f32 %v431, %v380
        %v550 = vmul.f32 %v432, %v380
        %v551 = vmul.f32 %v433, %v380
        %v552 = vadd.f32 %v546, %v549
        %v553 = vadd.f32 %v547, %v550
        %v554 = vadd.f32 %v548, %v551
        %v555 = vmul.f32 %v435, %v388
        %v556 = vmul.f32 %v436, %v388
        %v557 = vmul.f32 %v437, %v388
        %v558 = vadd.f32 %v552, %v555
        %v559 = vadd.f32 %v553, %v556
        %v560 = vadd.f32 %v554, %v557
        %v561 = vadd.f32 %v558, %v396
        %v562 = vadd.f32 %v559, %v396
        %v563 = vadd.f32 %v560, %v396
        %v564 = vmul.f32 %v427, %v401
        %v565 = vmul.f32 %v428, %v401
        %v566 = vmul.f32 %v429, %v401
        %v567 = vmul.f32 %v431, %v406
        %v568 = vmul.f32 %v432, %v406
        %v569 = vmul.f32 %v433, %v406
        %v570 = vadd.f32 %v564, %v567
        %v571 = vadd.f32 %v565, %v568
        %v572 = vadd.f32 %v566, %v569
        %v573 = vmul.f32 %v435, %v414
        %v574 = vmul.f32 %v436, %v414
        %v575 = vmul.f32 %v437, %v414
        %v576 = vadd.f32 %v570, %v573
        %v577 = vadd.f32 %v571, %v574
        %v578 = vadd.f32 %v572, %v575
        %v579 = vadd.f32 %v576, %v422
        %v580 = vadd.f32 %v577, %v422
        %v581 = vadd.f32 %v578, %v422
        %v582 = vpack.c.bf16 %v241, %v241
        %v583 = vpack.c.bf16 %v242, %v242
        %v584 = vpack.c.bf16 %v243, %v243
        %v585 = vpack.c.bf16 %v267, %v267
        %v586 = vpack.c.bf16 %v268, %v268
        %v587 = vpack.c.bf16 %v269, %v269
        %v588 = vpack.c.bf16 %v293, %v293
        %v589 = vpack.c.bf16 %v294, %v294
        %v590 = vpack.c.bf16 %v295, %v295
        %v591 = vpack.c.bf16 %v319, %v319
        %v592 = vpack.c.bf16 %v320, %v320
        %v593 = vpack.c.bf16 %v321, %v321
        %v594 = vpack.c.bf16 %v345, %v345
        %v595 = vpack.c.bf16 %v346, %v346
        %v596 = vpack.c.bf16 %v347, %v347
        %v597 = vpack.c.bf16 %v371, %v371
        %v598 = vpack.c.bf16 %v372, %v372
        %v599 = vpack.c.bf16 %v373, %v373
        %v600 = vpack.c.bf16 %v397, %v397
        %v601 = vpack.c.bf16 %v398, %v398
        %v602 = vpack.c.bf16 %v399, %v399
        %v603 = vpack.c.bf16 %v423, %v423
        %v604 = vpack.c.bf16 %v424, %v424
        %v605 = vpack.c.bf16 %v425, %v425
        %v606 = vpack.c.bf16 %v453, %v453
        %v607 = vpack.c.bf16 %v454, %v454
        %v608 = vpack.c.bf16 %v455, %v455
        %v609 = vpack.c.bf16 %v471, %v471
        %v610 = vpack.c.bf16 %v472, %v472
        %v611 = vpack.c.bf16 %v473, %v473
        %v612 = vpack.c.bf16 %v489, %v489
        %v613 = vpack.c.bf16 %v490, %v490
        %v614 = vpack.c.bf16 %v491, %v491
        %v615 = vpack.c.bf16 %v507, %v507
        %v616 = vpack.c.bf16 %v508, %v508
        %v617 = vpack.c.bf16 %v509, %v509
        %v618 = vpack.c.bf16 %v525, %v525
        %v619 = vpack.c.bf16 %v526, %v526
        %v620 = vpack.c.bf16 %v527, %v527
        %v621 = vpack.c.bf16 %v543, %v543
        %v622 = vpack.c.bf16 %v544, %v544
        %v623 = vpack.c.bf16 %v545, %v545
        %v624 = vpack.c.bf16 %v561, %v561
        %v625 = vpack.c.bf16 %v562, %v562
        %v626 = vpack.c.bf16 %v563, %v563
        %v627 = vpack.c.bf16 %v579, %v579
        %v628 = vpack.c.bf16 %v580, %v580
        %v629 = vpack.c.bf16 %v581, %v581
        %v633 = vunpack.c.l.b16 %v582
        %v634 = vunpack.c.l.b16 %v583
        %v635 = vunpack.c.l.b16 %v584
        %v636 = vpack.c.b16 %v634, %v633
        %v637 = vpack.c.b16 %v635, %v635
        %vm638 = vcmask 146432
        %v640 = vsel %vm638, %v636, 0
        %v643 = vsel %vm638, %v637, 0
        %645 = vmatpush.bf16.xpose.msra.mxu0 0
        %646 = vmatpush.bf16.xpose.msra.mxu0 0
        %647 = vmatpush.bf16.xpose.msra.mxu0 0
        %648 = vmatpush.bf16.xpose.msra.mxu0 0
        %649 = vmatpush.bf16.xpose.msra.mxu0 0
        %650 = vmatpush.bf16.xpose.msra.mxu0 0
        %651 = vmatpush.bf16.xpose.msra.mxu0 %v643
        %652 = vmatpush.bf16.xpose.msra.mxu0 %v640
        %653 = vmatmul.bf16.gmra.mxu0 %v640
        %v654 = vpop.f32.mrf.mxu0
        %v655 = vadd.f32 0.0, %v654
        %v656 = vpop.f32.mrf.mxu0
        %v657 = vadd.f32 0.0, %v656
        %658 = vmatmul.bf16.gmra.mxu0 %v643
        %v659 = vpop.f32.mrf.mxu0
        %v660 = vadd.f32 0.0, %v659
        %v661 = vpop.f32.mrf.mxu0
        %662 = vdwg.mxu0
        %v666 = vunpack.c.l.b16 %v585
        %v667 = vunpack.c.l.b16 %v586
        %v668 = vunpack.c.l.b16 %v587
        %v669 = vpack.c.b16 %v667, %v666
        %v670 = vpack.c.b16 %v668, %v668
        %v672 = vsel %vm638, %v669, 0
        %v675 = vsel %vm638, %v670, 0
        %677 = vmatpush.bf16.xpose.msra.mxu0 0
        %678 = vmatpush.bf16.xpose.msra.mxu0 0
        %679 = vmatpush.bf16.xpose.msra.mxu0 0
        %680 = vmatpush.bf16.xpose.msra.mxu0 0
        %681 = vmatpush.bf16.xpose.msra.mxu0 0
        %682 = vmatpush.bf16.xpose.msra.mxu0 0
        %683 = vmatpush.bf16.xpose.msra.mxu0 %v675
        %684 = vmatpush.bf16.xpose.msra.mxu0 %v672
        %685 = vmatmul.bf16.gmra.mxu0 %v672
        %v686 = vpop.f32.mrf.mxu0
        %v687 = vadd.f32 0.0, %v686
        %v688 = vpop.f32.mrf.mxu0
        %v689 = vadd.f32 0.0, %v688
        %690 = vmatmul.bf16.gmra.mxu0 %v675
        %v691 = vpop.f32.mrf.mxu0
        %v692 = vadd.f32 0.0, %v691
        %v693 = vpop.f32.mrf.mxu0
        %694 = vdwg.mxu0
        %v698 = vunpack.c.l.b16 %v588
        %v699 = vunpack.c.l.b16 %v589
        %v700 = vunpack.c.l.b16 %v590
        %v701 = vpack.c.b16 %v699, %v698
        %v702 = vpack.c.b16 %v700, %v700
        %v704 = vsel %vm638, %v701, 0
        %v707 = vsel %vm638, %v702, 0
        %709 = vmatpush.bf16.xpose.msra.mxu0 0
        %710 = vmatpush.bf16.xpose.msra.mxu0 0
        %711 = vmatpush.bf16.xpose.msra.mxu0 0
        %712 = vmatpush.bf16.xpose.msra.mxu0 0
        %713 = vmatpush.bf16.xpose.msra.mxu0 0
        %714 = vmatpush.bf16.xpose.msra.mxu0 0
        %715 = vmatpush.bf16.xpose.msra.mxu0 %v707
        %716 = vmatpush.bf16.xpose.msra.mxu0 %v704
        %717 = vmatmul.bf16.gmra.mxu0 %v704
        %v718 = vpop.f32.mrf.mxu0
        %v719 = vadd.f32 0.0, %v718
        %v720 = vpop.f32.mrf.mxu0
        %v721 = vadd.f32 0.0, %v720
        %722 = vmatmul.bf16.gmra.mxu0 %v707
        %v723 = vpop.f32.mrf.mxu0
        %v724 = vadd.f32 0.0, %v723
        %v725 = vpop.f32.mrf.mxu0
        %726 = vdwg.mxu0
        %v730 = vunpack.c.l.b16 %v591
        %v731 = vunpack.c.l.b16 %v592
        %v732 = vunpack.c.l.b16 %v593
        %v733 = vpack.c.b16 %v731, %v730
        %v734 = vpack.c.b16 %v732, %v732
        %v736 = vsel %vm638, %v733, 0
        %v739 = vsel %vm638, %v734, 0
        %741 = vmatpush.bf16.xpose.msra.mxu0 0
        %742 = vmatpush.bf16.xpose.msra.mxu0 0
        %743 = vmatpush.bf16.xpose.msra.mxu0 0
        %744 = vmatpush.bf16.xpose.msra.mxu0 0
        %745 = vmatpush.bf16.xpose.msra.mxu0 0
        %746 = vmatpush.bf16.xpose.msra.mxu0 0
        %747 = vmatpush.bf16.xpose.msra.mxu0 %v739
        %748 = vmatpush.bf16.xpose.msra.mxu0 %v736
        %749 = vmatmul.bf16.gmra.mxu0 %v736
        %v750 = vpop.f32.mrf.mxu0
        %v751 = vadd.f32 0.0, %v750
        %v752 = vpop.f32.mrf.mxu0
        %v753 = vadd.f32 0.0, %v752
        %754 = vmatmul.bf16.gmra.mxu0 %v739
        %v755 = vpop.f32.mrf.mxu0
        %v756 = vadd.f32 0.0, %v755
        %v757 = vpop.f32.mrf.mxu0
        %758 = vdwg.mxu0
        %v762 = vunpack.c.l.b16 %v594
        %v763 = vunpack.c.l.b16 %v595
        %v764 = vunpack.c.l.b16 %v596
        %v765 = vpack.c.b16 %v763, %v762
        %v766 = vpack.c.b16 %v764, %v764
        %v768 = vsel %vm638, %v765, 0
        %v771 = vsel %vm638, %v766, 0
        %773 = vmatpush.bf16.xpose.msra.mxu0 0
        %774 = vmatpush.bf16.xpose.msra.mxu0 0
        %775 = vmatpush.bf16.xpose.msra.mxu0 0
        %776 = vmatpush.bf16.xpose.msra.mxu0 0
        %777 = vmatpush.bf16.xpose.msra.mxu0 0
        %778 = vmatpush.bf16.xpose.msra.mxu0 0
        %779 = vmatpush.bf16.xpose.msra.mxu0 %v771
        %780 = vmatpush.bf16.xpose.msra.mxu0 %v768
        %781 = vmatmul.bf16.gmra.mxu0 %v768
        %v782 = vpop.f32.mrf.mxu0
        %v783 = vadd.f32 0.0, %v782
        %v784 = vpop.f32.mrf.mxu0
        %v785 = vadd.f32 0.0, %v784
        %786 = vmatmul.bf16.gmra.mxu0 %v771
        %v787 = vpop.f32.mrf.mxu0
        %v788 = vadd.f32 0.0, %v787
        %v789 = vpop.f32.mrf.mxu0
        %790 = vdwg.mxu0
        %v794 = vunpack.c.l.b16 %v597
        %v795 = vunpack.c.l.b16 %v598
        %v796 = vunpack.c.l.b16 %v599
        %v797 = vpack.c.b16 %v795, %v794
        %v798 = vpack.c.b16 %v796, %v796
        %v800 = vsel %vm638, %v797, 0
        %v803 = vsel %vm638, %v798, 0
        %805 = vmatpush.bf16.xpose.msra.mxu0 0
        %806 = vmatpush.bf16.xpose.msra.mxu0 0
        %807 = vmatpush.bf16.xpose.msra.mxu0 0
        %808 = vmatpush.bf16.xpose.msra.mxu0 0
        %809 = vmatpush.bf16.xpose.msra.mxu0 0
        %810 = vmatpush.bf16.xpose.msra.mxu0 0
        %811 = vmatpush.bf16.xpose.msra.mxu0 %v803
        %812 = vmatpush.bf16.xpose.msra.mxu0 %v800
        %813 = vmatmul.bf16.gmra.mxu0 %v800
        %v814 = vpop.f32.mrf.mxu0
        %v815 = vadd.f32 0.0, %v814
        %v816 = vpop.f32.mrf.mxu0
        %v817 = vadd.f32 0.0, %v816
        %818 = vmatmul.bf16.gmra.mxu0 %v803
        %v819 = vpop.f32.mrf.mxu0
        %v820 = vadd.f32 0.0, %v819
        %v821 = vpop.f32.mrf.mxu0
        %822 = vdwg.mxu0
        %v826 = vunpack.c.l.b16 %v600
        %v827 = vunpack.c.l.b16 %v601
        %v828 = vunpack.c.l.b16 %v602
        %v829 = vpack.c.b16 %v827, %v826
        %v830 = vpack.c.b16 %v828, %v828
        %v832 = vsel %vm638, %v829, 0
        %v835 = vsel %vm638, %v830, 0
        %837 = vmatpush.bf16.xpose.msra.mxu0 0
        %838 = vmatpush.bf16.xpose.msra.mxu0 0
        %839 = vmatpush.bf16.xpose.msra.mxu0 0
        %840 = vmatpush.bf16.xpose.msra.mxu0 0
        %841 = vmatpush.bf16.xpose.msra.mxu0 0
        %842 = vmatpush.bf16.xpose.msra.mxu0 0
        %843 = vmatpush.bf16.xpose.msra.mxu0 %v835
        %844 = vmatpush.bf16.xpose.msra.mxu0 %v832
        %845 = vmatmul.bf16.gmra.mxu0 %v832
        %v846 = vpop.f32.mrf.mxu0
        %v847 = vadd.f32 0.0, %v846
        %v848 = vpop.f32.mrf.mxu0
        %v849 = vadd.f32 0.0, %v848
        %850 = vmatmul.bf16.gmra.mxu0 %v835
        %v851 = vpop.f32.mrf.mxu0
        %v852 = vadd.f32 0.0, %v851
        %v853 = vpop.f32.mrf.mxu0
        %854 = vdwg.mxu0
        %v858 = vunpack.c.l.b16 %v603
        %v859 = vunpack.c.l.b16 %v604
        %v860 = vunpack.c.l.b16 %v605
        %v861 = vpack.c.b16 %v859, %v858
        %v862 = vpack.c.b16 %v860, %v860
        %v864 = vsel %vm638, %v861, 0
        %v867 = vsel %vm638, %v862, 0
        %869 = vmatpush.bf16.xpose.msra.mxu0 0
        %870 = vmatpush.bf16.xpose.msra.mxu0 0
        %871 = vmatpush.bf16.xpose.msra.mxu0 0
        %872 = vmatpush.bf16.xpose.msra.mxu0 0
        %873 = vmatpush.bf16.xpose.msra.mxu0 0
        %874 = vmatpush.bf16.xpose.msra.mxu0 0
        %875 = vmatpush.bf16.xpose.msra.mxu0 %v867
        %876 = vmatpush.bf16.xpose.msra.mxu0 %v864
        %877 = vmatmul.bf16.gmra.mxu0 %v864
        %v878 = vpop.f32.mrf.mxu0
        %v879 = vadd.f32 0.0, %v878
        %v880 = vpop.f32.mrf.mxu0
        %v881 = vadd.f32 0.0, %v880
        %882 = vmatmul.bf16.gmra.mxu0 %v867
        %v883 = vpop.f32.mrf.mxu0
        %v884 = vadd.f32 0.0, %v883
        %v885 = vpop.f32.mrf.mxu0
        %886 = vdwg.mxu0
        %v890 = vunpack.c.l.b16 %v606
        %v891 = vunpack.c.l.b16 %v607
        %v892 = vunpack.c.l.b16 %v608
        %v893 = vpack.c.b16 %v891, %v890
        %v894 = vpack.c.b16 %v892, %v892
        %v896 = vsel %vm638, %v893, 0
        %v899 = vsel %vm638, %v894, 0
        %901 = vmatpush.bf16.xpose.msra.mxu0 0
        %902 = vmatpush.bf16.xpose.msra.mxu0 0
        %903 = vmatpush.bf16.xpose.msra.mxu0 0
        %904 = vmatpush.bf16.xpose.msra.mxu0 0
        %905 = vmatpush.bf16.xpose.msra.mxu0 0
        %906 = vmatpush.bf16.xpose.msra.mxu0 0
        %907 = vmatpush.bf16.xpose.msra.mxu0 %v899
        %908 = vmatpush.bf16.xpose.msra.mxu0 %v896
        %909 = vmatmul.bf16.gmra.mxu0 %v896
        %v910 = vpop.f32.mrf.mxu0
        %v911 = vadd.f32 0.0, %v910
        %v912 = vpop.f32.mrf.mxu0
        %v913 = vadd.f32 0.0, %v912
        %914 = vmatmul.bf16.gmra.mxu0 %v899
        %v915 = vpop.f32.mrf.mxu0
        %v916 = vadd.f32 0.0, %v915
        %v917 = vpop.f32.mrf.mxu0
        %918 = vdwg.mxu0
        %v922 = vunpack.c.l.b16 %v609
        %v923 = vunpack.c.l.b16 %v610
        %v924 = vunpack.c.l.b16 %v611
        %v925 = vpack.c.b16 %v923, %v922
        %v926 = vpack.c.b16 %v924, %v924
        %v928 = vsel %vm638, %v925, 0
        %v931 = vsel %vm638, %v926, 0
        %933 = vmatpush.bf16.xpose.msra.mxu0 0
        %934 = vmatpush.bf16.xpose.msra.mxu0 0
        %935 = vmatpush.bf16.xpose.msra.mxu0 0
        %936 = vmatpush.bf16.xpose.msra.mxu0 0
        %937 = vmatpush.bf16.xpose.msra.mxu0 0
        %938 = vmatpush.bf16.xpose.msra.mxu0 0
        %939 = vmatpush.bf16.xpose.msra.mxu0 %v931
        %940 = vmatpush.bf16.xpose.msra.mxu0 %v928
        %941 = vmatmul.bf16.gmra.mxu0 %v928
        %v942 = vpop.f32.mrf.mxu0
        %v943 = vadd.f32 0.0, %v942
        %v944 = vpop.f32.mrf.mxu0
        %v945 = vadd.f32 0.0, %v944
        %946 = vmatmul.bf16.gmra.mxu0 %v931
        %v947 = vpop.f32.mrf.mxu0
        %v948 = vadd.f32 0.0, %v947
        %v949 = vpop.f32.mrf.mxu0
        %950 = vdwg.mxu0
        %v954 = vunpack.c.l.b16 %v612
        %v955 = vunpack.c.l.b16 %v613
        %v956 = vunpack.c.l.b16 %v614
        %v957 = vpack.c.b16 %v955, %v954
        %v958 = vpack.c.b16 %v956, %v956
        %v960 = vsel %vm638, %v957, 0
        %v963 = vsel %vm638, %v958, 0
        %965 = vmatpush.bf16.xpose.msra.mxu0 0
        %966 = vmatpush.bf16.xpose.msra.mxu0 0
        %967 = vmatpush.bf16.xpose.msra.mxu0 0
        %968 = vmatpush.bf16.xpose.msra.mxu0 0
        %969 = vmatpush.bf16.xpose.msra.mxu0 0
        %970 = vmatpush.bf16.xpose.msra.mxu0 0
        %971 = vmatpush.bf16.xpose.msra.mxu0 %v963
        %972 = vmatpush.bf16.xpose.msra.mxu0 %v960
        %973 = vmatmul.bf16.gmra.mxu0 %v960
        %v974 = vpop.f32.mrf.mxu0
        %v975 = vadd.f32 0.0, %v974
        %v976 = vpop.f32.mrf.mxu0
        %v977 = vadd.f32 0.0, %v976
        %978 = vmatmul.bf16.gmra.mxu0 %v963
        %v979 = vpop.f32.mrf.mxu0
        %v980 = vadd.f32 0.0, %v979
        %v981 = vpop.f32.mrf.mxu0
        %982 = vdwg.mxu0
        %v986 = vunpack.c.l.b16 %v615
        %v987 = vunpack.c.l.b16 %v616
        %v988 = vunpack.c.l.b16 %v617
        %v989 = vpack.c.b16 %v987, %v986
        %v990 = vpack.c.b16 %v988, %v988
        %v992 = vsel %vm638, %v989, 0
        %v995 = vsel %vm638, %v990, 0
        %997 = vmatpush.bf16.xpose.msra.mxu0 0
        %998 = vmatpush.bf16.xpose.msra.mxu0 0
        %999 = vmatpush.bf16.xpose.msra.mxu0 0
        %1000 = vmatpush.bf16.xpose.msra.mxu0 0
        %1001 = vmatpush.bf16.xpose.msra.mxu0 0
        %1002 = vmatpush.bf16.xpose.msra.mxu0 0
        %1003 = vmatpush.bf16.xpose.msra.mxu0 %v995
        %1004 = vmatpush.bf16.xpose.msra.mxu0 %v992
        %1005 = vmatmul.bf16.gmra.mxu0 %v992
        %v1006 = vpop.f32.mrf.mxu0
        %v1007 = vadd.f32 0.0, %v1006
        %v1008 = vpop.f32.mrf.mxu0
        %v1009 = vadd.f32 0.0, %v1008
        %1010 = vmatmul.bf16.gmra.mxu0 %v995
        %v1011 = vpop.f32.mrf.mxu0
        %v1012 = vadd.f32 0.0, %v1011
        %v1013 = vpop.f32.mrf.mxu0
        %1014 = vdwg.mxu0
        %v1018 = vunpack.c.l.b16 %v618
        %v1019 = vunpack.c.l.b16 %v619
        %v1020 = vunpack.c.l.b16 %v620
        %v1021 = vpack.c.b16 %v1019, %v1018
        %v1022 = vpack.c.b16 %v1020, %v1020
        %v1024 = vsel %vm638, %v1021, 0
        %v1027 = vsel %vm638, %v1022, 0
        %1029 = vmatpush.bf16.xpose.msra.mxu0 0
        %1030 = vmatpush.bf16.xpose.msra.mxu0 0
        %1031 = vmatpush.bf16.xpose.msra.mxu0 0
        %1032 = vmatpush.bf16.xpose.msra.mxu0 0
        %1033 = vmatpush.bf16.xpose.msra.mxu0 0
        %1034 = vmatpush.bf16.xpose.msra.mxu0 0
        %1035 = vmatpush.bf16.xpose.msra.mxu0 %v1027
        %1036 = vmatpush.bf16.xpose.msra.mxu0 %v1024
        %1037 = vmatmul.bf16.gmra.mxu0 %v1024
        %v1038 = vpop.f32.mrf.mxu0
        %v1039 = vadd.f32 0.0, %v1038
        %v1040 = vpop.f32.mrf.mxu0
        %v1041 = vadd.f32 0.0, %v1040
        %1042 = vmatmul.bf16.gmra.mxu0 %v1027
        %v1043 = vpop.f32.mrf.mxu0
        %v1044 = vadd.f32 0.0, %v1043
        %v1045 = vpop.f32.mrf.mxu0
        %1046 = vdwg.mxu0
        %v1050 = vunpack.c.l.b16 %v621
        %v1051 = vunpack.c.l.b16 %v622
        %v1052 = vunpack.c.l.b16 %v623
        %v1053 = vpack.c.b16 %v1051, %v1050
        %v1054 = vpack.c.b16 %v1052, %v1052
        %v1056 = vsel %vm638, %v1053, 0
        %v1059 = vsel %vm638, %v1054, 0
        %1061 = vmatpush.bf16.xpose.msra.mxu0 0
        %1062 = vmatpush.bf16.xpose.msra.mxu0 0
        %1063 = vmatpush.bf16.xpose.msra.mxu0 0
        %1064 = vmatpush.bf16.xpose.msra.mxu0 0
        %1065 = vmatpush.bf16.xpose.msra.mxu0 0
        %1066 = vmatpush.bf16.xpose.msra.mxu0 0
        %1067 = vmatpush.bf16.xpose.msra.mxu0 %v1059
        %1068 = vmatpush.bf16.xpose.msra.mxu0 %v1056
        %1069 = vmatmul.bf16.gmra.mxu0 %v1056
        %v1070 = vpop.f32.mrf.mxu0
        %v1071 = vadd.f32 0.0, %v1070
        %v1072 = vpop.f32.mrf.mxu0
        %v1073 = vadd.f32 0.0, %v1072
        %1074 = vmatmul.bf16.gmra.mxu0 %v1059
        %v1075 = vpop.f32.mrf.mxu0
        %v1076 = vadd.f32 0.0, %v1075
        %v1077 = vpop.f32.mrf.mxu0
        %1078 = vdwg.mxu0
        %v1082 = vunpack.c.l.b16 %v624
        %v1083 = vunpack.c.l.b16 %v625
        %v1084 = vunpack.c.l.b16 %v626
        %v1085 = vpack.c.b16 %v1083, %v1082
        %v1086 = vpack.c.b16 %v1084, %v1084
        %v1088 = vsel %vm638, %v1085, 0
        %v1091 = vsel %vm638, %v1086, 0
        %1093 = vmatpush.bf16.xpose.msra.mxu0 0
        %1094 = vmatpush.bf16.xpose.msra.mxu0 0
        %1095 = vmatpush.bf16.xpose.msra.mxu0 0
        %1096 = vmatpush.bf16.xpose.msra.mxu0 0
        %1097 = vmatpush.bf16.xpose.msra.mxu0 0
        %1098 = vmatpush.bf16.xpose.msra.mxu0 0
        %1099 = vmatpush.bf16.xpose.msra.mxu0 %v1091
        %1100 = vmatpush.bf16.xpose.msra.mxu0 %v1088
        %1101 = vmatmul.bf16.gmra.mxu0 %v1088
        %v1102 = vpop.f32.mrf.mxu0
        %v1103 = vadd.f32 0.0, %v1102
        %v1104 = vpop.f32.mrf.mxu0
        %v1105 = vadd.f32 0.0, %v1104
        %1106 = vmatmul.bf16.gmra.mxu0 %v1091
        %v1107 = vpop.f32.mrf.mxu0
        %v1108 = vadd.f32 0.0, %v1107
        %v1109 = vpop.f32.mrf.mxu0
        %1110 = vdwg.mxu0
        %v1114 = vunpack.c.l.b16 %v627
        %v1115 = vunpack.c.l.b16 %v628
        %v1116 = vunpack.c.l.b16 %v629
        %v1117 = vpack.c.b16 %v1115, %v1114
        %v1118 = vpack.c.b16 %v1116, %v1116
        %v1120 = vsel %vm638, %v1117, 0
        %v1123 = vsel %vm638, %v1118, 0
        %1125 = vmatpush.bf16.xpose.msra.mxu0 0
        %1126 = vmatpush.bf16.xpose.msra.mxu0 0
        %1127 = vmatpush.bf16.xpose.msra.mxu0 0
        %1128 = vmatpush.bf16.xpose.msra.mxu0 0
        %1129 = vmatpush.bf16.xpose.msra.mxu0 0
        %1130 = vmatpush.bf16.xpose.msra.mxu0 0
        %1131 = vmatpush.bf16.xpose.msra.mxu0 %v1123
        %1132 = vmatpush.bf16.xpose.msra.mxu0 %v1120
        %1133 = vmatmul.bf16.gmra.mxu0 %v1120
        %v1134 = vpop.f32.mrf.mxu0
        %v1135 = vadd.f32 0.0, %v1134
        %v1136 = vpop.f32.mrf.mxu0
        %v1137 = vadd.f32 0.0, %v1136
        %1138 = vmatmul.bf16.gmra.mxu0 %v1123
        %v1139 = vpop.f32.mrf.mxu0
        %v1140 = vadd.f32 0.0, %v1139
        %v1141 = vpop.f32.mrf.mxu0
        %1142 = vdwg.mxu0
        %v1143 = vmul.f32 %v655, 0.35355338
        %v1144 = vmul.f32 %v657, 0.35355338
        %v1145 = vmul.f32 %v660, 0.35355338
        %v1146 = vmul.f32 %v687, 0.35355338
        %v1147 = vmul.f32 %v689, 0.35355338
        %v1148 = vmul.f32 %v692, 0.35355338
        %v1149 = vmul.f32 %v719, 0.35355338
        %v1150 = vmul.f32 %v721, 0.35355338
        %v1151 = vmul.f32 %v724, 0.35355338
        %v1152 = vmul.f32 %v751, 0.35355338
        %v1153 = vmul.f32 %v753, 0.35355338
        %v1154 = vmul.f32 %v756, 0.35355338
        %v1155 = vmul.f32 %v783, 0.35355338
        %v1156 = vmul.f32 %v785, 0.35355338
        %v1157 = vmul.f32 %v788, 0.35355338
        %v1158 = vmul.f32 %v815, 0.35355338
        %v1159 = vmul.f32 %v817, 0.35355338
        %v1160 = vmul.f32 %v820, 0.35355338
        %v1161 = vmul.f32 %v847, 0.35355338
        %v1162 = vmul.f32 %v849, 0.35355338
        %v1163 = vmul.f32 %v852, 0.35355338
        %v1164 = vmul.f32 %v879, 0.35355338
        %v1165 = vmul.f32 %v881, 0.35355338
        %v1166 = vmul.f32 %v884, 0.35355338
        %v1167 = vmul.f32 %v911, 0.35355338
        %v1168 = vmul.f32 %v913, 0.35355338
        %v1169 = vmul.f32 %v916, 0.35355338
        %v1170 = vmul.f32 %v943, 0.35355338
        %v1171 = vmul.f32 %v945, 0.35355338
        %v1172 = vmul.f32 %v948, 0.35355338
        %v1173 = vmul.f32 %v975, 0.35355338
        %v1174 = vmul.f32 %v977, 0.35355338
        %v1175 = vmul.f32 %v980, 0.35355338
        %v1176 = vmul.f32 %v1007, 0.35355338
        %v1177 = vmul.f32 %v1009, 0.35355338
        %v1178 = vmul.f32 %v1012, 0.35355338
        %v1179 = vmul.f32 %v1039, 0.35355338
        %v1180 = vmul.f32 %v1041, 0.35355338
        %v1181 = vmul.f32 %v1044, 0.35355338
        %v1182 = vmul.f32 %v1071, 0.35355338
        %v1183 = vmul.f32 %v1073, 0.35355338
        %v1184 = vmul.f32 %v1076, 0.35355338
        %v1185 = vmul.f32 %v1103, 0.35355338
        %v1186 = vmul.f32 %v1105, 0.35355338
        %v1187 = vmul.f32 %v1108, 0.35355338
        %v1188 = vmul.f32 %v1135, 0.35355338
        %v1189 = vmul.f32 %v1137, 0.35355338
        %v1190 = vmul.f32 %v1140, 0.35355338
        %v1191 = vsel %vm638, %v1143, -inf
        %1192 = vmax.xlane.f32.xlu0 %v1191
        %v1193 = vpop.xlane.xlu0 %1192
        %v1194 = vsel %vm638, %v1144, -inf
        %1195 = vmax.xlane.f32.xlu0 %v1194
        %v1196 = vpop.xlane.xlu0 %1195
        %vm1197 = vcmask 140288
        %v1198 = vsel %vm1197, %v1145, -inf
        %1199 = vmax.xlane.f32.xlu0 %v1198
        %v1200 = vpop.xlane.xlu0 %1199
        %v1201 = vsel %vm638, %v1146, -inf
        %1202 = vmax.xlane.f32.xlu0 %v1201
        %v1203 = vpop.xlane.xlu0 %1202
        %v1204 = vsel %vm638, %v1147, -inf
        %1205 = vmax.xlane.f32.xlu0 %v1204
        %v1206 = vpop.xlane.xlu0 %1205
        %v1207 = vsel %vm1197, %v1148, -inf
        %1208 = vmax.xlane.f32.xlu0 %v1207
        %v1209 = vpop.xlane.xlu0 %1208
        %v1210 = vsel %vm638, %v1149, -inf
        %1211 = vmax.xlane.f32.xlu0 %v1210
        %v1212 = vpop.xlane.xlu0 %1211
        %v1213 = vsel %vm638, %v1150, -inf
        %1214 = vmax.xlane.f32.xlu0 %v1213
        %v1215 = vpop.xlane.xlu0 %1214
        %v1216 = vsel %vm1197, %v1151, -inf
        %1217 = vmax.xlane.f32.xlu0 %v1216
        %v1218 = vpop.xlane.xlu0 %1217
        %v1219 = vsel %vm638, %v1152, -inf
        %1220 = vmax.xlane.f32.xlu0 %v1219
        %v1221 = vpop.xlane.xlu0 %1220
        %v1222 = vsel %vm638, %v1153, -inf
        %1223 = vmax.xlane.f32.xlu0 %v1222
        %v1224 = vpop.xlane.xlu0 %1223
        %v1225 = vsel %vm1197, %v1154, -inf
        %1226 = vmax.xlane.f32.xlu0 %v1225
        %v1227 = vpop.xlane.xlu0 %1226
        %v1228 = vsel %vm638, %v1155, -inf
        %1229 = vmax.xlane.f32.xlu0 %v1228
        %v1230 = vpop.xlane.xlu0 %1229
        %v1231 = vsel %vm638, %v1156, -inf
        %1232 = vmax.xlane.f32.xlu0 %v1231
        %v1233 = vpop.xlane.xlu0 %1232
        %v1234 = vsel %vm1197, %v1157, -inf
        %1235 = vmax.xlane.f32.xlu0 %v1234
        %v1236 = vpop.xlane.xlu0 %1235
        %v1237 = vsel %vm638, %v1158, -inf
        %1238 = vmax.xlane.f32.xlu0 %v1237
        %v1239 = vpop.xlane.xlu0 %1238
        %v1240 = vsel %vm638, %v1159, -inf
        %1241 = vmax.xlane.f32.xlu0 %v1240
        %v1242 = vpop.xlane.xlu0 %1241
        %v1243 = vsel %vm1197, %v1160, -inf
        %1244 = vmax.xlane.f32.xlu0 %v1243
        %v1245 = vpop.xlane.xlu0 %1244
        %v1246 = vsel %vm638, %v1161, -inf
        %1247 = vmax.xlane.f32.xlu0 %v1246
        %v1248 = vpop.xlane.xlu0 %1247
        %v1249 = vsel %vm638, %v1162, -inf
        %1250 = vmax.xlane.f32.xlu0 %v1249
        %v1251 = vpop.xlane.xlu0 %1250
        %v1252 = vsel %vm1197, %v1163, -inf
        %1253 = vmax.xlane.f32.xlu0 %v1252
        %v1254 = vpop.xlane.xlu0 %1253
        %v1255 = vsel %vm638, %v1164, -inf
        %1256 = vmax.xlane.f32.xlu0 %v1255
        %v1257 = vpop.xlane.xlu0 %1256
        %v1258 = vsel %vm638, %v1165, -inf
        %1259 = vmax.xlane.f32.xlu0 %v1258
        %v1260 = vpop.xlane.xlu0 %1259
        %v1261 = vsel %vm1197, %v1166, -inf
        %1262 = vmax.xlane.f32.xlu0 %v1261
        %v1263 = vpop.xlane.xlu0 %1262
        %v1264 = vsel %vm638, %v1167, -inf
        %1265 = vmax.xlane.f32.xlu0 %v1264
        %v1266 = vpop.xlane.xlu0 %1265
        %v1267 = vsel %vm638, %v1168, -inf
        %1268 = vmax.xlane.f32.xlu0 %v1267
        %v1269 = vpop.xlane.xlu0 %1268
        %v1270 = vsel %vm1197, %v1169, -inf
        %1271 = vmax.xlane.f32.xlu0 %v1270
        %v1272 = vpop.xlane.xlu0 %1271
        %v1273 = vsel %vm638, %v1170, -inf
        %1274 = vmax.xlane.f32.xlu0 %v1273
        %v1275 = vpop.xlane.xlu0 %1274
        %v1276 = vsel %vm638, %v1171, -inf
        %1277 = vmax.xlane.f32.xlu0 %v1276
        %v1278 = vpop.xlane.xlu0 %1277
        %v1279 = vsel %vm1197, %v1172, -inf
        %1280 = vmax.xlane.f32.xlu0 %v1279
        %v1281 = vpop.xlane.xlu0 %1280
        %v1282 = vsel %vm638, %v1173, -inf
        %1283 = vmax.xlane.f32.xlu0 %v1282
        %v1284 = vpop.xlane.xlu0 %1283
        %v1285 = vsel %vm638, %v1174, -inf
        %1286 = vmax.xlane.f32.xlu0 %v1285
        %v1287 = vpop.xlane.xlu0 %1286
        %v1288 = vsel %vm1197, %v1175, -inf
        %1289 = vmax.xlane.f32.xlu0 %v1288
        %v1290 = vpop.xlane.xlu0 %1289
        %v1291 = vsel %vm638, %v1176, -inf
        %1292 = vmax.xlane.f32.xlu0 %v1291
        %v1293 = vpop.xlane.xlu0 %1292
        %v1294 = vsel %vm638, %v1177, -inf
        %1295 = vmax.xlane.f32.xlu0 %v1294
        %v1296 = vpop.xlane.xlu0 %1295
        %v1297 = vsel %vm1197, %v1178, -inf
        %1298 = vmax.xlane.f32.xlu0 %v1297
        %v1299 = vpop.xlane.xlu0 %1298
        %v1300 = vsel %vm638, %v1179, -inf
        %1301 = vmax.xlane.f32.xlu0 %v1300
        %v1302 = vpop.xlane.xlu0 %1301
        %v1303 = vsel %vm638, %v1180, -inf
        %1304 = vmax.xlane.f32.xlu0 %v1303
        %v1305 = vpop.xlane.xlu0 %1304
        %v1306 = vsel %vm1197, %v1181, -inf
        %1307 = vmax.xlane.f32.xlu0 %v1306
        %v1308 = vpop.xlane.xlu0 %1307
        %v1309 = vsel %vm638, %v1182, -inf
        %1310 = vmax.xlane.f32.xlu0 %v1309
        %v1311 = vpop.xlane.xlu0 %1310
        %v1312 = vsel %vm638, %v1183, -inf
        %1313 = vmax.xlane.f32.xlu0 %v1312
        %v1314 = vpop.xlane.xlu0 %1313
        %v1315 = vsel %vm1197, %v1184, -inf
        %1316 = vmax.xlane.f32.xlu0 %v1315
        %v1317 = vpop.xlane.xlu0 %1316
        %v1318 = vsel %vm638, %v1185, -inf
        %1319 = vmax.xlane.f32.xlu0 %v1318
        %v1320 = vpop.xlane.xlu0 %1319
        %v1321 = vsel %vm638, %v1186, -inf
        %1322 = vmax.xlane.f32.xlu0 %v1321
        %v1323 = vpop.xlane.xlu0 %1322
        %v1324 = vsel %vm1197, %v1187, -inf
        %1325 = vmax.xlane.f32.xlu0 %v1324
        %v1326 = vpop.xlane.xlu0 %1325
        %v1327 = vsel %vm638, %v1188, -inf
        %1328 = vmax.xlane.f32.xlu0 %v1327
        %v1329 = vpop.xlane.xlu0 %1328
        %v1330 = vsel %vm638, %v1189, -inf
        %1331 = vmax.xlane.f32.xlu0 %v1330
        %v1332 = vpop.xlane.xlu0 %1331
        %v1333 = vsel %vm1197, %v1190, -inf
        %1334 = vmax.xlane.f32.xlu0 %v1333
        %v1335 = vpop.xlane.xlu0 %1334
        %v1336 = vsub.f32 %v1143, %v1193
        %v1337 = vsub.f32 %v1144, %v1196
        %v1338 = vsub.f32 %v1145, %v1200
        %v1339 = vsub.f32 %v1146, %v1203
        %v1340 = vsub.f32 %v1147, %v1206
        %v1341 = vsub.f32 %v1148, %v1209
        %v1342 = vsub.f32 %v1149, %v1212
        %v1343 = vsub.f32 %v1150, %v1215
        %v1344 = vsub.f32 %v1151, %v1218
        %v1345 = vsub.f32 %v1152, %v1221
        %v1346 = vsub.f32 %v1153, %v1224
        %v1347 = vsub.f32 %v1154, %v1227
        %v1348 = vsub.f32 %v1155, %v1230
        %v1349 = vsub.f32 %v1156, %v1233
        %v1350 = vsub.f32 %v1157, %v1236
        %v1351 = vsub.f32 %v1158, %v1239
        %v1352 = vsub.f32 %v1159, %v1242
        %v1353 = vsub.f32 %v1160, %v1245
        %v1354 = vsub.f32 %v1161, %v1248
        %v1355 = vsub.f32 %v1162, %v1251
        %v1356 = vsub.f32 %v1163, %v1254
        %v1357 = vsub.f32 %v1164, %v1257
        %v1358 = vsub.f32 %v1165, %v1260
        %v1359 = vsub.f32 %v1166, %v1263
        %v1360 = vsub.f32 %v1167, %v1266
        %v1361 = vsub.f32 %v1168, %v1269
        %v1362 = vsub.f32 %v1169, %v1272
        %v1363 = vsub.f32 %v1170, %v1275
        %v1364 = vsub.f32 %v1171, %v1278
        %v1365 = vsub.f32 %v1172, %v1281
        %v1366 = vsub.f32 %v1173, %v1284
        %v1367 = vsub.f32 %v1174, %v1287
        %v1368 = vsub.f32 %v1175, %v1290
        %v1369 = vsub.f32 %v1176, %v1293
        %v1370 = vsub.f32 %v1177, %v1296
        %v1371 = vsub.f32 %v1178, %v1299
        %v1372 = vsub.f32 %v1179, %v1302
        %v1373 = vsub.f32 %v1180, %v1305
        %v1374 = vsub.f32 %v1181, %v1308
        %v1375 = vsub.f32 %v1182, %v1311
        %v1376 = vsub.f32 %v1183, %v1314
        %v1377 = vsub.f32 %v1184, %v1317
        %v1378 = vsub.f32 %v1185, %v1320
        %v1379 = vsub.f32 %v1186, %v1323
        %v1380 = vsub.f32 %v1187, %v1326
        %v1381 = vsub.f32 %v1188, %v1329
        %v1382 = vsub.f32 %v1189, %v1332
        %v1383 = vsub.f32 %v1190, %v1335
        %v1384 = vmul.f32 %v1336, 1.442695
        %v1385 = vpow.pop %v1384
        %v1386 = vmul.f32 %v1337, 1.442695
        %v1387 = vpow.pop %v1386
        %v1388 = vmul.f32 %v1338, 1.442695
        %v1389 = vpow.pop %v1388
        %v1390 = vmul.f32 %v1339, 1.442695
        %v1391 = vpow.pop %v1390
        %v1392 = vmul.f32 %v1340, 1.442695
        %v1393 = vpow.pop %v1392
        %v1394 = vmul.f32 %v1341, 1.442695
        %v1395 = vpow.pop %v1394
        %v1396 = vmul.f32 %v1342, 1.442695
        %v1397 = vpow.pop %v1396
        %v1398 = vmul.f32 %v1343, 1.442695
        %v1399 = vpow.pop %v1398
        %v1400 = vmul.f32 %v1344, 1.442695
        %v1401 = vpow.pop %v1400
        %v1402 = vmul.f32 %v1345, 1.442695
        %v1403 = vpow.pop %v1402
        %v1404 = vmul.f32 %v1346, 1.442695
        %v1405 = vpow.pop %v1404
        %v1406 = vmul.f32 %v1347, 1.442695
        %v1407 = vpow.pop %v1406
        %v1408 = vmul.f32 %v1348, 1.442695
        %v1409 = vpow.pop %v1408
        %v1410 = vmul.f32 %v1349, 1.442695
        %v1411 = vpow.pop %v1410
        %v1412 = vmul.f32 %v1350, 1.442695
        %v1413 = vpow.pop %v1412
        %v1414 = vmul.f32 %v1351, 1.442695
        %v1415 = vpow.pop %v1414
        %v1416 = vmul.f32 %v1352, 1.442695
        %v1417 = vpow.pop %v1416
        %v1418 = vmul.f32 %v1353, 1.442695
        %v1419 = vpow.pop %v1418
        %v1420 = vmul.f32 %v1354, 1.442695
        %v1421 = vpow.pop %v1420
        %v1422 = vmul.f32 %v1355, 1.442695
        %v1423 = vpow.pop %v1422
        %v1424 = vmul.f32 %v1356, 1.442695
        %v1425 = vpow.pop %v1424
        %v1426 = vmul.f32 %v1357, 1.442695
        %v1427 = vpow.pop %v1426
        %v1428 = vmul.f32 %v1358, 1.442695
        %v1429 = vpow.pop %v1428
        %v1430 = vmul.f32 %v1359, 1.442695
        %v1431 = vpow.pop %v1430
        %v1432 = vmul.f32 %v1360, 1.442695
        %v1433 = vpow.pop %v1432
        %v1434 = vmul.f32 %v1361, 1.442695
        %v1435 = vpow.pop %v1434
        %v1436 = vmul.f32 %v1362, 1.442695
        %v1437 = vpow.pop %v1436
        %v1438 = vmul.f32 %v1363, 1.442695
        %v1439 = vpow.pop %v1438
        %v1440 = vmul.f32 %v1364, 1.442695
        %v1441 = vpow.pop %v1440
        %v1442 = vmul.f32 %v1365, 1.442695
        %v1443 = vpow.pop %v1442
        %v1444 = vmul.f32 %v1366, 1.442695
        %v1445 = vpow.pop %v1444
        %v1446 = vmul.f32 %v1367, 1.442695
        %v1447 = vpow.pop %v1446
        %v1448 = vmul.f32 %v1368, 1.442695
        %v1449 = vpow.pop %v1448
        %v1450 = vmul.f32 %v1369, 1.442695
        %v1451 = vpow.pop %v1450
        %v1452 = vmul.f32 %v1370, 1.442695
        %v1453 = vpow.pop %v1452
        %v1454 = vmul.f32 %v1371, 1.442695
        %v1455 = vpow.pop %v1454
        %v1456 = vmul.f32 %v1372, 1.442695
        %v1457 = vpow.pop %v1456
        %v1458 = vmul.f32 %v1373, 1.442695
        %v1459 = vpow.pop %v1458
        %v1460 = vmul.f32 %v1374, 1.442695
        %v1461 = vpow.pop %v1460
        %v1462 = vmul.f32 %v1375, 1.442695
        %v1463 = vpow.pop %v1462
        %v1464 = vmul.f32 %v1376, 1.442695
        %v1465 = vpow.pop %v1464
        %v1466 = vmul.f32 %v1377, 1.442695
        %v1467 = vpow.pop %v1466
        %v1468 = vmul.f32 %v1378, 1.442695
        %v1469 = vpow.pop %v1468
        %v1470 = vmul.f32 %v1379, 1.442695
        %v1471 = vpow.pop %v1470
        %v1472 = vmul.f32 %v1380, 1.442695
        %v1473 = vpow.pop %v1472
        %v1474 = vmul.f32 %v1381, 1.442695
        %v1475 = vpow.pop %v1474
        %v1476 = vmul.f32 %v1382, 1.442695
        %v1477 = vpow.pop %v1476
        %v1478 = vmul.f32 %v1383, 1.442695
        %v1479 = vpow.pop %v1478
        %v1480 = vsel %vm638, %v1385, 0.0
        %1481 = vadd.xlane.f32.xlu0 %v1480
        %v1482 = vpop.xlane.xlu0 %1481
        %v1483 = vsel %vm638, %v1387, 0.0
        %1484 = vadd.xlane.f32.xlu0 %v1483
        %v1485 = vpop.xlane.xlu0 %1484
        %v1486 = vsel %vm1197, %v1389, 0.0
        %1487 = vadd.xlane.f32.xlu0 %v1486
        %v1488 = vpop.xlane.xlu0 %1487
        %v1489 = vsel %vm638, %v1391, 0.0
        %1490 = vadd.xlane.f32.xlu0 %v1489
        %v1491 = vpop.xlane.xlu0 %1490
        %v1492 = vsel %vm638, %v1393, 0.0
        %1493 = vadd.xlane.f32.xlu0 %v1492
        %v1494 = vpop.xlane.xlu0 %1493
        %v1495 = vsel %vm1197, %v1395, 0.0
        %1496 = vadd.xlane.f32.xlu0 %v1495
        %v1497 = vpop.xlane.xlu0 %1496
        %v1498 = vsel %vm638, %v1397, 0.0
        %1499 = vadd.xlane.f32.xlu0 %v1498
        %v1500 = vpop.xlane.xlu0 %1499
        %v1501 = vsel %vm638, %v1399, 0.0
        %1502 = vadd.xlane.f32.xlu0 %v1501
        %v1503 = vpop.xlane.xlu0 %1502
        %v1504 = vsel %vm1197, %v1401, 0.0
        %1505 = vadd.xlane.f32.xlu0 %v1504
        %v1506 = vpop.xlane.xlu0 %1505
        %v1507 = vsel %vm638, %v1403, 0.0
        %1508 = vadd.xlane.f32.xlu0 %v1507
        %v1509 = vpop.xlane.xlu0 %1508
        %v1510 = vsel %vm638, %v1405, 0.0
        %1511 = vadd.xlane.f32.xlu0 %v1510
        %v1512 = vpop.xlane.xlu0 %1511
        %v1513 = vsel %vm1197, %v1407, 0.0
        %1514 = vadd.xlane.f32.xlu0 %v1513
        %v1515 = vpop.xlane.xlu0 %1514
        %v1516 = vsel %vm638, %v1409, 0.0
        %1517 = vadd.xlane.f32.xlu0 %v1516
        %v1518 = vpop.xlane.xlu0 %1517
        %v1519 = vsel %vm638, %v1411, 0.0
        %1520 = vadd.xlane.f32.xlu0 %v1519
        %v1521 = vpop.xlane.xlu0 %1520
        %v1522 = vsel %vm1197, %v1413, 0.0
        %1523 = vadd.xlane.f32.xlu0 %v1522
        %v1524 = vpop.xlane.xlu0 %1523
        %v1525 = vsel %vm638, %v1415, 0.0
        %1526 = vadd.xlane.f32.xlu0 %v1525
        %v1527 = vpop.xlane.xlu0 %1526
        %v1528 = vsel %vm638, %v1417, 0.0
        %1529 = vadd.xlane.f32.xlu0 %v1528
        %v1530 = vpop.xlane.xlu0 %1529
        %v1531 = vsel %vm1197, %v1419, 0.0
        %1532 = vadd.xlane.f32.xlu0 %v1531
        %v1533 = vpop.xlane.xlu0 %1532
        %v1534 = vsel %vm638, %v1421, 0.0
        %1535 = vadd.xlane.f32.xlu0 %v1534
        %v1536 = vpop.xlane.xlu0 %1535
        %v1537 = vsel %vm638, %v1423, 0.0
        %1538 = vadd.xlane.f32.xlu0 %v1537
        %v1539 = vpop.xlane.xlu0 %1538
        %v1540 = vsel %vm1197, %v1425, 0.0
        %1541 = vadd.xlane.f32.xlu0 %v1540
        %v1542 = vpop.xlane.xlu0 %1541
        %v1543 = vsel %vm638, %v1427, 0.0
        %1544 = vadd.xlane.f32.xlu0 %v1543
        %v1545 = vpop.xlane.xlu0 %1544
        %v1546 = vsel %vm638, %v1429, 0.0
        %1547 = vadd.xlane.f32.xlu0 %v1546
        %v1548 = vpop.xlane.xlu0 %1547
        %v1549 = vsel %vm1197, %v1431, 0.0
        %1550 = vadd.xlane.f32.xlu0 %v1549
        %v1551 = vpop.xlane.xlu0 %1550
        %v1552 = vsel %vm638, %v1433, 0.0
        %1553 = vadd.xlane.f32.xlu0 %v1552
        %v1554 = vpop.xlane.xlu0 %1553
        %v1555 = vsel %vm638, %v1435, 0.0
        %1556 = vadd.xlane.f32.xlu0 %v1555
        %v1557 = vpop.xlane.xlu0 %1556
        %v1558 = vsel %vm1197, %v1437, 0.0
        %1559 = vadd.xlane.f32.xlu0 %v1558
        %v1560 = vpop.xlane.xlu0 %1559
        %v1561 = vsel %vm638, %v1439, 0.0
        %1562 = vadd.xlane.f32.xlu0 %v1561
        %v1563 = vpop.xlane.xlu0 %1562
        %v1564 = vsel %vm638, %v1441, 0.0
        %1565 = vadd.xlane.f32.xlu0 %v1564
        %v1566 = vpop.xlane.xlu0 %1565
        %v1567 = vsel %vm1197, %v1443, 0.0
        %1568 = vadd.xlane.f32.xlu0 %v1567
        %v1569 = vpop.xlane.xlu0 %1568
        %v1570 = vsel %vm638, %v1445, 0.0
        %1571 = vadd.xlane.f32.xlu0 %v1570
        %v1572 = vpop.xlane.xlu0 %1571
        %v1573 = vsel %vm638, %v1447, 0.0
        %1574 = vadd.xlane.f32.xlu0 %v1573
        %v1575 = vpop.xlane.xlu0 %1574
        %v1576 = vsel %vm1197, %v1449, 0.0
        %1577 = vadd.xlane.f32.xlu0 %v1576
        %v1578 = vpop.xlane.xlu0 %1577
        %v1579 = vsel %vm638, %v1451, 0.0
        %1580 = vadd.xlane.f32.xlu0 %v1579
        %v1581 = vpop.xlane.xlu0 %1580
        %v1582 = vsel %vm638, %v1453, 0.0
        %1583 = vadd.xlane.f32.xlu0 %v1582
        %v1584 = vpop.xlane.xlu0 %1583
        %v1585 = vsel %vm1197, %v1455, 0.0
        %1586 = vadd.xlane.f32.xlu0 %v1585
        %v1587 = vpop.xlane.xlu0 %1586
        %v1588 = vsel %vm638, %v1457, 0.0
        %1589 = vadd.xlane.f32.xlu0 %v1588
        %v1590 = vpop.xlane.xlu0 %1589
        %v1591 = vsel %vm638, %v1459, 0.0
        %1592 = vadd.xlane.f32.xlu0 %v1591
        %v1593 = vpop.xlane.xlu0 %1592
        %v1594 = vsel %vm1197, %v1461, 0.0
        %1595 = vadd.xlane.f32.xlu0 %v1594
        %v1596 = vpop.xlane.xlu0 %1595
        %v1597 = vsel %vm638, %v1463, 0.0
        %1598 = vadd.xlane.f32.xlu0 %v1597
        %v1599 = vpop.xlane.xlu0 %1598
        %v1600 = vsel %vm638, %v1465, 0.0
        %1601 = vadd.xlane.f32.xlu0 %v1600
        %v1602 = vpop.xlane.xlu0 %1601
        %v1603 = vsel %vm1197, %v1467, 0.0
        %1604 = vadd.xlane.f32.xlu0 %v1603
        %v1605 = vpop.xlane.xlu0 %1604
        %v1606 = vsel %vm638, %v1469, 0.0
        %1607 = vadd.xlane.f32.xlu0 %v1606
        %v1608 = vpop.xlane.xlu0 %1607
        %v1609 = vsel %vm638, %v1471, 0.0
        %1610 = vadd.xlane.f32.xlu0 %v1609
        %v1611 = vpop.xlane.xlu0 %1610
        %v1612 = vsel %vm1197, %v1473, 0.0
        %1613 = vadd.xlane.f32.xlu0 %v1612
        %v1614 = vpop.xlane.xlu0 %1613
        %v1615 = vsel %vm638, %v1475, 0.0
        %1616 = vadd.xlane.f32.xlu0 %v1615
        %v1617 = vpop.xlane.xlu0 %1616
        %v1618 = vsel %vm638, %v1477, 0.0
        %1619 = vadd.xlane.f32.xlu0 %v1618
        %v1620 = vpop.xlane.xlu0 %1619
        %v1621 = vsel %vm1197, %v1479, 0.0
        %1622 = vadd.xlane.f32.xlu0 %v1621
        %v1623 = vpop.xlane.xlu0 %1622
        %v1624 = vrcp.pop %v1482
        %v1625 = vrcp.pop %v1485
        %v1626 = vrcp.pop %v1488
        %v1627 = vrcp.pop %v1491
        %v1628 = vrcp.pop %v1494
        %v1629 = vrcp.pop %v1497
        %v1630 = vrcp.pop %v1500
        %v1631 = vrcp.pop %v1503
        %v1632 = vrcp.pop %v1506
        %v1633 = vrcp.pop %v1509
        %v1634 = vrcp.pop %v1512
        %v1635 = vrcp.pop %v1515
        %v1636 = vrcp.pop %v1518
        %v1637 = vrcp.pop %v1521
        %v1638 = vrcp.pop %v1524
        %v1639 = vrcp.pop %v1527
        %v1640 = vrcp.pop %v1530
        %v1641 = vrcp.pop %v1533
        %v1642 = vrcp.pop %v1536
        %v1643 = vrcp.pop %v1539
        %v1644 = vrcp.pop %v1542
        %v1645 = vrcp.pop %v1545
        %v1646 = vrcp.pop %v1548
        %v1647 = vrcp.pop %v1551
        %v1648 = vrcp.pop %v1554
        %v1649 = vrcp.pop %v1557
        %v1650 = vrcp.pop %v1560
        %v1651 = vrcp.pop %v1563
        %v1652 = vrcp.pop %v1566
        %v1653 = vrcp.pop %v1569
        %v1654 = vrcp.pop %v1572
        %v1655 = vrcp.pop %v1575
        %v1656 = vrcp.pop %v1578
        %v1657 = vrcp.pop %v1581
        %v1658 = vrcp.pop %v1584
        %v1659 = vrcp.pop %v1587
        %v1660 = vrcp.pop %v1590
        %v1661 = vrcp.pop %v1593
        %v1662 = vrcp.pop %v1596
        %v1663 = vrcp.pop %v1599
        %v1664 = vrcp.pop %v1602
        %v1665 = vrcp.pop %v1605
        %v1666 = vrcp.pop %v1608
        %v1667 = vrcp.pop %v1611
        %v1668 = vrcp.pop %v1614
        %v1669 = vrcp.pop %v1617
        %v1670 = vrcp.pop %v1620
        %v1671 = vrcp.pop %v1623
        %v1672 = vmul.f32 %v1385, %v1624
        %v1673 = vmul.f32 %v1387, %v1625
        %v1674 = vmul.f32 %v1389, %v1626
        %v1675 = vmul.f32 %v1391, %v1627
        %v1676 = vmul.f32 %v1393, %v1628
        %v1677 = vmul.f32 %v1395, %v1629
        %v1678 = vmul.f32 %v1397, %v1630
        %v1679 = vmul.f32 %v1399, %v1631
        %v1680 = vmul.f32 %v1401, %v1632
        %v1681 = vmul.f32 %v1403, %v1633
        %v1682 = vmul.f32 %v1405, %v1634
        %v1683 = vmul.f32 %v1407, %v1635
        %v1684 = vmul.f32 %v1409, %v1636
        %v1685 = vmul.f32 %v1411, %v1637
        %v1686 = vmul.f32 %v1413, %v1638
        %v1687 = vmul.f32 %v1415, %v1639
        %v1688 = vmul.f32 %v1417, %v1640
        %v1689 = vmul.f32 %v1419, %v1641
        %v1690 = vmul.f32 %v1421, %v1642
        %v1691 = vmul.f32 %v1423, %v1643
        %v1692 = vmul.f32 %v1425, %v1644
        %v1693 = vmul.f32 %v1427, %v1645
        %v1694 = vmul.f32 %v1429, %v1646
        %v1695 = vmul.f32 %v1431, %v1647
        %v1696 = vmul.f32 %v1433, %v1648
        %v1697 = vmul.f32 %v1435, %v1649
        %v1698 = vmul.f32 %v1437, %v1650
        %v1699 = vmul.f32 %v1439, %v1651
        %v1700 = vmul.f32 %v1441, %v1652
        %v1701 = vmul.f32 %v1443, %v1653
        %v1702 = vmul.f32 %v1445, %v1654
        %v1703 = vmul.f32 %v1447, %v1655
        %v1704 = vmul.f32 %v1449, %v1656
        %v1705 = vmul.f32 %v1451, %v1657
        %v1706 = vmul.f32 %v1453, %v1658
        %v1707 = vmul.f32 %v1455, %v1659
        %v1708 = vmul.f32 %v1457, %v1660
        %v1709 = vmul.f32 %v1459, %v1661
        %v1710 = vmul.f32 %v1461, %v1662
        %v1711 = vmul.f32 %v1463, %v1663
        %v1712 = vmul.f32 %v1465, %v1664
        %v1713 = vmul.f32 %v1467, %v1665
        %v1714 = vmul.f32 %v1469, %v1666
        %v1715 = vmul.f32 %v1471, %v1667
        %v1716 = vmul.f32 %v1473, %v1668
        %v1717 = vmul.f32 %v1475, %v1669
        %v1718 = vmul.f32 %v1477, %v1670
        %v1719 = vmul.f32 %v1479, %v1671
        %v1720 = vpack.c.bf16 %v1672, %v1672
        %v1721 = vpack.c.bf16 %v1673, %v1673
        %v1722 = vpack.c.bf16 %v1674, %v1674
        %v1723 = vpack.c.bf16 %v1675, %v1675
        %v1724 = vpack.c.bf16 %v1676, %v1676
        %v1725 = vpack.c.bf16 %v1677, %v1677
        %v1726 = vpack.c.bf16 %v1678, %v1678
        %v1727 = vpack.c.bf16 %v1679, %v1679
        %v1728 = vpack.c.bf16 %v1680, %v1680
        %v1729 = vpack.c.bf16 %v1681, %v1681
        %v1730 = vpack.c.bf16 %v1682, %v1682
        %v1731 = vpack.c.bf16 %v1683, %v1683
        %v1732 = vpack.c.bf16 %v1684, %v1684
        %v1733 = vpack.c.bf16 %v1685, %v1685
        %v1734 = vpack.c.bf16 %v1686, %v1686
        %v1735 = vpack.c.bf16 %v1687, %v1687
        %v1736 = vpack.c.bf16 %v1688, %v1688
        %v1737 = vpack.c.bf16 %v1689, %v1689
        %v1738 = vpack.c.bf16 %v1690, %v1690
        %v1739 = vpack.c.bf16 %v1691, %v1691
        %v1740 = vpack.c.bf16 %v1692, %v1692
        %v1741 = vpack.c.bf16 %v1693, %v1693
        %v1742 = vpack.c.bf16 %v1694, %v1694
        %v1743 = vpack.c.bf16 %v1695, %v1695
        %v1744 = vpack.c.bf16 %v1696, %v1696
        %v1745 = vpack.c.bf16 %v1697, %v1697
        %v1746 = vpack.c.bf16 %v1698, %v1698
        %v1747 = vpack.c.bf16 %v1699, %v1699
        %v1748 = vpack.c.bf16 %v1700, %v1700
        %v1749 = vpack.c.bf16 %v1701, %v1701
        %v1750 = vpack.c.bf16 %v1702, %v1702
        %v1751 = vpack.c.bf16 %v1703, %v1703
        %v1752 = vpack.c.bf16 %v1704, %v1704
        %v1753 = vpack.c.bf16 %v1705, %v1705
        %v1754 = vpack.c.bf16 %v1706, %v1706
        %v1755 = vpack.c.bf16 %v1707, %v1707
        %v1756 = vpack.c.bf16 %v1708, %v1708
        %v1757 = vpack.c.bf16 %v1709, %v1709
        %v1758 = vpack.c.bf16 %v1710, %v1710
        %v1759 = vpack.c.bf16 %v1711, %v1711
        %v1760 = vpack.c.bf16 %v1712, %v1712
        %v1761 = vpack.c.bf16 %v1713, %v1713
        %v1762 = vpack.c.bf16 %v1714, %v1714
        %v1763 = vpack.c.bf16 %v1715, %v1715
        %v1764 = vpack.c.bf16 %v1716, %v1716
        %v1765 = vpack.c.bf16 %v1717, %v1717
        %v1766 = vpack.c.bf16 %v1718, %v1718
        %v1767 = vpack.c.bf16 %v1719, %v1719
        %v1771 = vunpack.c.l.b16 %v1720
        %v1772 = vunpack.c.l.b16 %v1721
        %v1773 = vunpack.c.l.b16 %v1722
        %v1774 = vpack.c.b16 %v1772, %v1771
        %v1775 = vpack.c.b16 %v1773, %v1773
        %v1778 = vsel %vm638, %v1774, 0
        %v1781 = vsel %vm638, %v1775, 0
        %vm1783 = vcmask 1040384
        %v1784 = vsel %vm1783, %v637, 0
        %1786 = vmatpush.bf16.msra.mxu0 0
        %1787 = vmatpush.bf16.msra.mxu0 0
        %1788 = vmatpush.bf16.msra.mxu0 0
        %1789 = vmatpush.bf16.msra.mxu0 0
        %1790 = vmatpush.bf16.msra.mxu0 0
        %1791 = vmatpush.bf16.msra.mxu0 0
        %1792 = vmatpush.bf16.msra.mxu0 %v1784
        %1793 = vmatpush.bf16.msra.mxu0 %v636
        %1794 = vmatmul.bf16.gmra.mxu0 %v1778
        %v1795 = vpop.f32.mrf.mxu0
        %v1796 = vadd.f32 0.0, %v1795
        %v1797 = vpop.f32.mrf.mxu0
        %v1798 = vadd.f32 0.0, %v1797
        %1799 = vmatmul.bf16.gmra.mxu0 %v1781
        %v1800 = vpop.f32.mrf.mxu0
        %v1801 = vadd.f32 0.0, %v1800
        %v1802 = vpop.f32.mrf.mxu0
        %1803 = vdwg.mxu0
        %v1807 = vunpack.c.l.b16 %v1723
        %v1808 = vunpack.c.l.b16 %v1724
        %v1809 = vunpack.c.l.b16 %v1725
        %v1810 = vpack.c.b16 %v1808, %v1807
        %v1811 = vpack.c.b16 %v1809, %v1809
        %v1814 = vsel %vm638, %v1810, 0
        %v1817 = vsel %vm638, %v1811, 0
        %v1819 = vsel %vm1783, %v670, 0
        %1821 = vmatpush.bf16.msra.mxu0 0
        %1822 = vmatpush.bf16.msra.mxu0 0
        %1823 = vmatpush.bf16.msra.mxu0 0
        %1824 = vmatpush.bf16.msra.mxu0 0
        %1825 = vmatpush.bf16.msra.mxu0 0
        %1826 = vmatpush.bf16.msra.mxu0 0
        %1827 = vmatpush.bf16.msra.mxu0 %v1819
        %1828 = vmatpush.bf16.msra.mxu0 %v669
        %1829 = vmatmul.bf16.gmra.mxu0 %v1814
        %v1830 = vpop.f32.mrf.mxu0
        %v1831 = vadd.f32 0.0, %v1830
        %v1832 = vpop.f32.mrf.mxu0
        %v1833 = vadd.f32 0.0, %v1832
        %1834 = vmatmul.bf16.gmra.mxu0 %v1817
        %v1835 = vpop.f32.mrf.mxu0
        %v1836 = vadd.f32 0.0, %v1835
        %v1837 = vpop.f32.mrf.mxu0
        %1838 = vdwg.mxu0
        %v1842 = vunpack.c.l.b16 %v1726
        %v1843 = vunpack.c.l.b16 %v1727
        %v1844 = vunpack.c.l.b16 %v1728
        %v1845 = vpack.c.b16 %v1843, %v1842
        %v1846 = vpack.c.b16 %v1844, %v1844
        %v1849 = vsel %vm638, %v1845, 0
        %v1852 = vsel %vm638, %v1846, 0
        %v1854 = vsel %vm1783, %v702, 0
        %1856 = vmatpush.bf16.msra.mxu0 0
        %1857 = vmatpush.bf16.msra.mxu0 0
        %1858 = vmatpush.bf16.msra.mxu0 0
        %1859 = vmatpush.bf16.msra.mxu0 0
        %1860 = vmatpush.bf16.msra.mxu0 0
        %1861 = vmatpush.bf16.msra.mxu0 0
        %1862 = vmatpush.bf16.msra.mxu0 %v1854
        %1863 = vmatpush.bf16.msra.mxu0 %v701
        %1864 = vmatmul.bf16.gmra.mxu0 %v1849
        %v1865 = vpop.f32.mrf.mxu0
        %v1866 = vadd.f32 0.0, %v1865
        %v1867 = vpop.f32.mrf.mxu0
        %v1868 = vadd.f32 0.0, %v1867
        %1869 = vmatmul.bf16.gmra.mxu0 %v1852
        %v1870 = vpop.f32.mrf.mxu0
        %v1871 = vadd.f32 0.0, %v1870
        %v1872 = vpop.f32.mrf.mxu0
        %1873 = vdwg.mxu0
        %v1877 = vunpack.c.l.b16 %v1729
        %v1878 = vunpack.c.l.b16 %v1730
        %v1879 = vunpack.c.l.b16 %v1731
        %v1880 = vpack.c.b16 %v1878, %v1877
        %v1881 = vpack.c.b16 %v1879, %v1879
        %v1884 = vsel %vm638, %v1880, 0
        %v1887 = vsel %vm638, %v1881, 0
        %v1889 = vsel %vm1783, %v734, 0
        %1891 = vmatpush.bf16.msra.mxu0 0
        %1892 = vmatpush.bf16.msra.mxu0 0
        %1893 = vmatpush.bf16.msra.mxu0 0
        %1894 = vmatpush.bf16.msra.mxu0 0
        %1895 = vmatpush.bf16.msra.mxu0 0
        %1896 = vmatpush.bf16.msra.mxu0 0
        %1897 = vmatpush.bf16.msra.mxu0 %v1889
        %1898 = vmatpush.bf16.msra.mxu0 %v733
        %1899 = vmatmul.bf16.gmra.mxu0 %v1884
        %v1900 = vpop.f32.mrf.mxu0
        %v1901 = vadd.f32 0.0, %v1900
        %v1902 = vpop.f32.mrf.mxu0
        %v1903 = vadd.f32 0.0, %v1902
        %1904 = vmatmul.bf16.gmra.mxu0 %v1887
        %v1905 = vpop.f32.mrf.mxu0
        %v1906 = vadd.f32 0.0, %v1905
        %v1907 = vpop.f32.mrf.mxu0
        %1908 = vdwg.mxu0
        %v1912 = vunpack.c.l.b16 %v1732
        %v1913 = vunpack.c.l.b16 %v1733
        %v1914 = vunpack.c.l.b16 %v1734
        %v1915 = vpack.c.b16 %v1913, %v1912
        %v1916 = vpack.c.b16 %v1914, %v1914
        %v1919 = vsel %vm638, %v1915, 0
        %v1922 = vsel %vm638, %v1916, 0
        %v1924 = vsel %vm1783, %v766, 0
        %1926 = vmatpush.bf16.msra.mxu0 0
        %1927 = vmatpush.bf16.msra.mxu0 0
        %1928 = vmatpush.bf16.msra.mxu0 0
        %1929 = vmatpush.bf16.msra.mxu0 0
        %1930 = vmatpush.bf16.msra.mxu0 0
        %1931 = vmatpush.bf16.msra.mxu0 0
        %1932 = vmatpush.bf16.msra.mxu0 %v1924
        %1933 = vmatpush.bf16.msra.mxu0 %v765
        %1934 = vmatmul.bf16.gmra.mxu0 %v1919
        %v1935 = vpop.f32.mrf.mxu0
        %v1936 = vadd.f32 0.0, %v1935
        %v1937 = vpop.f32.mrf.mxu0
        %v1938 = vadd.f32 0.0, %v1937
        %1939 = vmatmul.bf16.gmra.mxu0 %v1922
        %v1940 = vpop.f32.mrf.mxu0
        %v1941 = vadd.f32 0.0, %v1940
        %v1942 = vpop.f32.mrf.mxu0
        %1943 = vdwg.mxu0
        %v1947 = vunpack.c.l.b16 %v1735
        %v1948 = vunpack.c.l.b16 %v1736
        %v1949 = vunpack.c.l.b16 %v1737
        %v1950 = vpack.c.b16 %v1948, %v1947
        %v1951 = vpack.c.b16 %v1949, %v1949
        %v1954 = vsel %vm638, %v1950, 0
        %v1957 = vsel %vm638, %v1951, 0
        %v1959 = vsel %vm1783, %v798, 0
        %1961 = vmatpush.bf16.msra.mxu0 0
        %1962 = vmatpush.bf16.msra.mxu0 0
        %1963 = vmatpush.bf16.msra.mxu0 0
        %1964 = vmatpush.bf16.msra.mxu0 0
        %1965 = vmatpush.bf16.msra.mxu0 0
        %1966 = vmatpush.bf16.msra.mxu0 0
        %1967 = vmatpush.bf16.msra.mxu0 %v1959
        %1968 = vmatpush.bf16.msra.mxu0 %v797
        %1969 = vmatmul.bf16.gmra.mxu0 %v1954
        %v1970 = vpop.f32.mrf.mxu0
        %v1971 = vadd.f32 0.0, %v1970
        %v1972 = vpop.f32.mrf.mxu0
        %v1973 = vadd.f32 0.0, %v1972
        %1974 = vmatmul.bf16.gmra.mxu0 %v1957
        %v1975 = vpop.f32.mrf.mxu0
        %v1976 = vadd.f32 0.0, %v1975
        %v1977 = vpop.f32.mrf.mxu0
        %1978 = vdwg.mxu0
        %v1982 = vunpack.c.l.b16 %v1738
        %v1983 = vunpack.c.l.b16 %v1739
        %v1984 = vunpack.c.l.b16 %v1740
        %v1985 = vpack.c.b16 %v1983, %v1982
        %v1986 = vpack.c.b16 %v1984, %v1984
        %v1989 = vsel %vm638, %v1985, 0
        %v1992 = vsel %vm638, %v1986, 0
        %v1994 = vsel %vm1783, %v830, 0
        %1996 = vmatpush.bf16.msra.mxu0 0
        %1997 = vmatpush.bf16.msra.mxu0 0
        %1998 = vmatpush.bf16.msra.mxu0 0
        %1999 = vmatpush.bf16.msra.mxu0 0
        %2000 = vmatpush.bf16.msra.mxu0 0
        %2001 = vmatpush.bf16.msra.mxu0 0
        %2002 = vmatpush.bf16.msra.mxu0 %v1994
        %2003 = vmatpush.bf16.msra.mxu0 %v829
        %2004 = vmatmul.bf16.gmra.mxu0 %v1989
        %v2005 = vpop.f32.mrf.mxu0
        %v2006 = vadd.f32 0.0, %v2005
        %v2007 = vpop.f32.mrf.mxu0
        %v2008 = vadd.f32 0.0, %v2007
        %2009 = vmatmul.bf16.gmra.mxu0 %v1992
        %v2010 = vpop.f32.mrf.mxu0
        %v2011 = vadd.f32 0.0, %v2010
        %v2012 = vpop.f32.mrf.mxu0
        %2013 = vdwg.mxu0
        %v2017 = vunpack.c.l.b16 %v1741
        %v2018 = vunpack.c.l.b16 %v1742
        %v2019 = vunpack.c.l.b16 %v1743
        %v2020 = vpack.c.b16 %v2018, %v2017
        %v2021 = vpack.c.b16 %v2019, %v2019
        %v2024 = vsel %vm638, %v2020, 0
        %v2027 = vsel %vm638, %v2021, 0
        %v2029 = vsel %vm1783, %v862, 0
        %2031 = vmatpush.bf16.msra.mxu0 0
        %2032 = vmatpush.bf16.msra.mxu0 0
        %2033 = vmatpush.bf16.msra.mxu0 0
        %2034 = vmatpush.bf16.msra.mxu0 0
        %2035 = vmatpush.bf16.msra.mxu0 0
        %2036 = vmatpush.bf16.msra.mxu0 0
        %2037 = vmatpush.bf16.msra.mxu0 %v2029
        %2038 = vmatpush.bf16.msra.mxu0 %v861
        %2039 = vmatmul.bf16.gmra.mxu0 %v2024
        %v2040 = vpop.f32.mrf.mxu0
        %v2041 = vadd.f32 0.0, %v2040
        %v2042 = vpop.f32.mrf.mxu0
        %v2043 = vadd.f32 0.0, %v2042
        %2044 = vmatmul.bf16.gmra.mxu0 %v2027
        %v2045 = vpop.f32.mrf.mxu0
        %v2046 = vadd.f32 0.0, %v2045
        %v2047 = vpop.f32.mrf.mxu0
        %2048 = vdwg.mxu0
        %v2052 = vunpack.c.l.b16 %v1744
        %v2053 = vunpack.c.l.b16 %v1745
        %v2054 = vunpack.c.l.b16 %v1746
        %v2055 = vpack.c.b16 %v2053, %v2052
        %v2056 = vpack.c.b16 %v2054, %v2054
        %v2059 = vsel %vm638, %v2055, 0
        %v2062 = vsel %vm638, %v2056, 0
        %v2064 = vsel %vm1783, %v894, 0
        %2066 = vmatpush.bf16.msra.mxu0 0
        %2067 = vmatpush.bf16.msra.mxu0 0
        %2068 = vmatpush.bf16.msra.mxu0 0
        %2069 = vmatpush.bf16.msra.mxu0 0
        %2070 = vmatpush.bf16.msra.mxu0 0
        %2071 = vmatpush.bf16.msra.mxu0 0
        %2072 = vmatpush.bf16.msra.mxu0 %v2064
        %2073 = vmatpush.bf16.msra.mxu0 %v893
        %2074 = vmatmul.bf16.gmra.mxu0 %v2059
        %v2075 = vpop.f32.mrf.mxu0
        %v2076 = vadd.f32 0.0, %v2075
        %v2077 = vpop.f32.mrf.mxu0
        %v2078 = vadd.f32 0.0, %v2077
        %2079 = vmatmul.bf16.gmra.mxu0 %v2062
        %v2080 = vpop.f32.mrf.mxu0
        %v2081 = vadd.f32 0.0, %v2080
        %v2082 = vpop.f32.mrf.mxu0
        %2083 = vdwg.mxu0
        %v2087 = vunpack.c.l.b16 %v1747
        %v2088 = vunpack.c.l.b16 %v1748
        %v2089 = vunpack.c.l.b16 %v1749
        %v2090 = vpack.c.b16 %v2088, %v2087
        %v2091 = vpack.c.b16 %v2089, %v2089
        %v2094 = vsel %vm638, %v2090, 0
        %v2097 = vsel %vm638, %v2091, 0
        %v2099 = vsel %vm1783, %v926, 0
        %2101 = vmatpush.bf16.msra.mxu0 0
        %2102 = vmatpush.bf16.msra.mxu0 0
        %2103 = vmatpush.bf16.msra.mxu0 0
        %2104 = vmatpush.bf16.msra.mxu0 0
        %2105 = vmatpush.bf16.msra.mxu0 0
        %2106 = vmatpush.bf16.msra.mxu0 0
        %2107 = vmatpush.bf16.msra.mxu0 %v2099
        %2108 = vmatpush.bf16.msra.mxu0 %v925
        %2109 = vmatmul.bf16.gmra.mxu0 %v2094
        %v2110 = vpop.f32.mrf.mxu0
        %v2111 = vadd.f32 0.0, %v2110
        %v2112 = vpop.f32.mrf.mxu0
        %v2113 = vadd.f32 0.0, %v2112
        %2114 = vmatmul.bf16.gmra.mxu0 %v2097
        %v2115 = vpop.f32.mrf.mxu0
        %v2116 = vadd.f32 0.0, %v2115
        %v2117 = vpop.f32.mrf.mxu0
        %2118 = vdwg.mxu0
        %v2122 = vunpack.c.l.b16 %v1750
        %v2123 = vunpack.c.l.b16 %v1751
        %v2124 = vunpack.c.l.b16 %v1752
        %v2125 = vpack.c.b16 %v2123, %v2122
        %v2126 = vpack.c.b16 %v2124, %v2124
        %v2129 = vsel %vm638, %v2125, 0
        %v2132 = vsel %vm638, %v2126, 0
        %v2134 = vsel %vm1783, %v958, 0
        %2136 = vmatpush.bf16.msra.mxu0 0
        %2137 = vmatpush.bf16.msra.mxu0 0
        %2138 = vmatpush.bf16.msra.mxu0 0
        %2139 = vmatpush.bf16.msra.mxu0 0
        %2140 = vmatpush.bf16.msra.mxu0 0
        %2141 = vmatpush.bf16.msra.mxu0 0
        %2142 = vmatpush.bf16.msra.mxu0 %v2134
        %2143 = vmatpush.bf16.msra.mxu0 %v957
        %2144 = vmatmul.bf16.gmra.mxu0 %v2129
        %v2145 = vpop.f32.mrf.mxu0
        %v2146 = vadd.f32 0.0, %v2145
        %v2147 = vpop.f32.mrf.mxu0
        %v2148 = vadd.f32 0.0, %v2147
        %2149 = vmatmul.bf16.gmra.mxu0 %v2132
        %v2150 = vpop.f32.mrf.mxu0
        %v2151 = vadd.f32 0.0, %v2150
        %v2152 = vpop.f32.mrf.mxu0
        %2153 = vdwg.mxu0
        %v2157 = vunpack.c.l.b16 %v1753
        %v2158 = vunpack.c.l.b16 %v1754
        %v2159 = vunpack.c.l.b16 %v1755
        %v2160 = vpack.c.b16 %v2158, %v2157
        %v2161 = vpack.c.b16 %v2159, %v2159
        %v2164 = vsel %vm638, %v2160, 0
        %v2167 = vsel %vm638, %v2161, 0
        %v2169 = vsel %vm1783, %v990, 0
        %2171 = vmatpush.bf16.msra.mxu0 0
        %2172 = vmatpush.bf16.msra.mxu0 0
        %2173 = vmatpush.bf16.msra.mxu0 0
        %2174 = vmatpush.bf16.msra.mxu0 0
        %2175 = vmatpush.bf16.msra.mxu0 0
        %2176 = vmatpush.bf16.msra.mxu0 0
        %2177 = vmatpush.bf16.msra.mxu0 %v2169
        %2178 = vmatpush.bf16.msra.mxu0 %v989
        %2179 = vmatmul.bf16.gmra.mxu0 %v2164
        %v2180 = vpop.f32.mrf.mxu0
        %v2181 = vadd.f32 0.0, %v2180
        %v2182 = vpop.f32.mrf.mxu0
        %v2183 = vadd.f32 0.0, %v2182
        %2184 = vmatmul.bf16.gmra.mxu0 %v2167
        %v2185 = vpop.f32.mrf.mxu0
        %v2186 = vadd.f32 0.0, %v2185
        %v2187 = vpop.f32.mrf.mxu0
        %2188 = vdwg.mxu0
        %v2192 = vunpack.c.l.b16 %v1756
        %v2193 = vunpack.c.l.b16 %v1757
        %v2194 = vunpack.c.l.b16 %v1758
        %v2195 = vpack.c.b16 %v2193, %v2192
        %v2196 = vpack.c.b16 %v2194, %v2194
        %v2199 = vsel %vm638, %v2195, 0
        %v2202 = vsel %vm638, %v2196, 0
        %v2204 = vsel %vm1783, %v1022, 0
        %2206 = vmatpush.bf16.msra.mxu0 0
        %2207 = vmatpush.bf16.msra.mxu0 0
        %2208 = vmatpush.bf16.msra.mxu0 0
        %2209 = vmatpush.bf16.msra.mxu0 0
        %2210 = vmatpush.bf16.msra.mxu0 0
        %2211 = vmatpush.bf16.msra.mxu0 0
        %2212 = vmatpush.bf16.msra.mxu0 %v2204
        %2213 = vmatpush.bf16.msra.mxu0 %v1021
        %2214 = vmatmul.bf16.gmra.mxu0 %v2199
        %v2215 = vpop.f32.mrf.mxu0
        %v2216 = vadd.f32 0.0, %v2215
        %v2217 = vpop.f32.mrf.mxu0
        %v2218 = vadd.f32 0.0, %v2217
        %2219 = vmatmul.bf16.gmra.mxu0 %v2202
        %v2220 = vpop.f32.mrf.mxu0
        %v2221 = vadd.f32 0.0, %v2220
        %v2222 = vpop.f32.mrf.mxu0
        %2223 = vdwg.mxu0
        %v2227 = vunpack.c.l.b16 %v1759
        %v2228 = vunpack.c.l.b16 %v1760
        %v2229 = vunpack.c.l.b16 %v1761
        %v2230 = vpack.c.b16 %v2228, %v2227
        %v2231 = vpack.c.b16 %v2229, %v2229
        %v2234 = vsel %vm638, %v2230, 0
        %v2237 = vsel %vm638, %v2231, 0
        %v2239 = vsel %vm1783, %v1054, 0
        %2241 = vmatpush.bf16.msra.mxu0 0
        %2242 = vmatpush.bf16.msra.mxu0 0
        %2243 = vmatpush.bf16.msra.mxu0 0
        %2244 = vmatpush.bf16.msra.mxu0 0
        %2245 = vmatpush.bf16.msra.mxu0 0
        %2246 = vmatpush.bf16.msra.mxu0 0
        %2247 = vmatpush.bf16.msra.mxu0 %v2239
        %2248 = vmatpush.bf16.msra.mxu0 %v1053
        %2249 = vmatmul.bf16.gmra.mxu0 %v2234
        %v2250 = vpop.f32.mrf.mxu0
        %v2251 = vadd.f32 0.0, %v2250
        %v2252 = vpop.f32.mrf.mxu0
        %v2253 = vadd.f32 0.0, %v2252
        %2254 = vmatmul.bf16.gmra.mxu0 %v2237
        %v2255 = vpop.f32.mrf.mxu0
        %v2256 = vadd.f32 0.0, %v2255
        %v2257 = vpop.f32.mrf.mxu0
        %2258 = vdwg.mxu0
        %v2262 = vunpack.c.l.b16 %v1762
        %v2263 = vunpack.c.l.b16 %v1763
        %v2264 = vunpack.c.l.b16 %v1764
        %v2265 = vpack.c.b16 %v2263, %v2262
        %v2266 = vpack.c.b16 %v2264, %v2264
        %v2269 = vsel %vm638, %v2265, 0
        %v2272 = vsel %vm638, %v2266, 0
        %v2274 = vsel %vm1783, %v1086, 0
        %2276 = vmatpush.bf16.msra.mxu0 0
        %2277 = vmatpush.bf16.msra.mxu0 0
        %2278 = vmatpush.bf16.msra.mxu0 0
        %2279 = vmatpush.bf16.msra.mxu0 0
        %2280 = vmatpush.bf16.msra.mxu0 0
        %2281 = vmatpush.bf16.msra.mxu0 0
        %2282 = vmatpush.bf16.msra.mxu0 %v2274
        %2283 = vmatpush.bf16.msra.mxu0 %v1085
        %2284 = vmatmul.bf16.gmra.mxu0 %v2269
        %v2285 = vpop.f32.mrf.mxu0
        %v2286 = vadd.f32 0.0, %v2285
        %v2287 = vpop.f32.mrf.mxu0
        %v2288 = vadd.f32 0.0, %v2287
        %2289 = vmatmul.bf16.gmra.mxu0 %v2272
        %v2290 = vpop.f32.mrf.mxu0
        %v2291 = vadd.f32 0.0, %v2290
        %v2292 = vpop.f32.mrf.mxu0
        %2293 = vdwg.mxu0
        %v2297 = vunpack.c.l.b16 %v1765
        %v2298 = vunpack.c.l.b16 %v1766
        %v2299 = vunpack.c.l.b16 %v1767
        %v2300 = vpack.c.b16 %v2298, %v2297
        %v2301 = vpack.c.b16 %v2299, %v2299
        %v2304 = vsel %vm638, %v2300, 0
        %v2307 = vsel %vm638, %v2301, 0
        %v2309 = vsel %vm1783, %v1118, 0
        %2311 = vmatpush.bf16.msra.mxu0 0
        %2312 = vmatpush.bf16.msra.mxu0 0
        %2313 = vmatpush.bf16.msra.mxu0 0
        %2314 = vmatpush.bf16.msra.mxu0 0
        %2315 = vmatpush.bf16.msra.mxu0 0
        %2316 = vmatpush.bf16.msra.mxu0 0
        %2317 = vmatpush.bf16.msra.mxu0 %v2309
        %2318 = vmatpush.bf16.msra.mxu0 %v1117
        %2319 = vmatmul.bf16.gmra.mxu0 %v2304
        %v2320 = vpop.f32.mrf.mxu0
        %v2321 = vadd.f32 0.0, %v2320
        %v2322 = vpop.f32.mrf.mxu0
        %v2323 = vadd.f32 0.0, %v2322
        %2324 = vmatmul.bf16.gmra.mxu0 %v2307
        %v2325 = vpop.f32.mrf.mxu0
        %v2326 = vadd.f32 0.0, %v2325
        %v2327 = vpop.f32.mrf.mxu0
        %2328 = vdwg.mxu0
        %2329 = vst.msk [vmem:[%s204] sm:$0xff] %vm638, %v1796
        %2330 = vst.msk [vmem:[%s204 + $0x8] sm:$0xff] %vm638, %v1798
        %2331 = vst.msk [vmem:[%s204 + $0x10] sm:$0x3] %vm1197, %v1801
        %2332 = vst.msk [vmem:[%s204 + $0x18] sm:$0xff] %vm638, %v1831
        %2333 = vst.msk [vmem:[%s204 + $0x20] sm:$0xff] %vm638, %v1833
        %2334 = vst.msk [vmem:[%s204 + $0x28] sm:$0x3] %vm1197, %v1836
        %2335 = vst.msk [vmem:[%s204 + $0x30] sm:$0xff] %vm638, %v1866
        %2336 = vst.msk [vmem:[%s204 + $0x38] sm:$0xff] %vm638, %v1868
        %2337 = vst.msk [vmem:[%s204 + $0x40] sm:$0x3] %vm1197, %v1871
        %2338 = vst.msk [vmem:[%s204 + $0x48] sm:$0xff] %vm638, %v1901
        %2339 = vst.msk [vmem:[%s204 + $0x50] sm:$0xff] %vm638, %v1903
        %2340 = vst.msk [vmem:[%s204 + $0x58] sm:$0x3] %vm1197, %v1906
        %2341 = vst.msk [vmem:[%s204 + $0x60] sm:$0xff] %vm638, %v1936
        %2342 = vst.msk [vmem:[%s204 + $0x68] sm:$0xff] %vm638, %v1938
        %2343 = vst.msk [vmem:[%s204 + $0x70] sm:$0x3] %vm1197, %v1941
        %2344 = vst.msk [vmem:[%s204 + $0x78] sm:$0xff] %vm638, %v1971
        %2345 = vst.msk [vmem:[%s204 + $0x80] sm:$0xff] %vm638, %v1973
        %2346 = vst.msk [vmem:[%s204 + $0x88] sm:$0x3] %vm1197, %v1976
        %2347 = vst.msk [vmem:[%s204 + $0x90] sm:$0xff] %vm638, %v2006
        %2348 = vst.msk [vmem:[%s204 + $0x98] sm:$0xff] %vm638, %v2008
        %2349 = vst.msk [vmem:[%s204 + $0xa0] sm:$0x3] %vm1197, %v2011
        %2350 = vst.msk [vmem:[%s204 + $0xa8] sm:$0xff] %vm638, %v2041
        %2351 = vst.msk [vmem:[%s204 + $0xb0] sm:$0xff] %vm638, %v2043
        %2352 = vst.msk [vmem:[%s204 + $0xb8] sm:$0x3] %vm1197, %v2046
        %2353 = vst.msk [vmem:[%s204 + $0xc0] sm:$0xff] %vm638, %v2076
        %2354 = vst.msk [vmem:[%s204 + $0xc8] sm:$0xff] %vm638, %v2078
        %2355 = vst.msk [vmem:[%s204 + $0xd0] sm:$0x3] %vm1197, %v2081
        %2356 = vst.msk [vmem:[%s204 + $0xd8] sm:$0xff] %vm638, %v2111
        %2357 = vst.msk [vmem:[%s204 + $0xe0] sm:$0xff] %vm638, %v2113
        %2358 = vst.msk [vmem:[%s204 + $0xe8] sm:$0x3] %vm1197, %v2116
        %2359 = vst.msk [vmem:[%s204 + $0xf0] sm:$0xff] %vm638, %v2146
        %2360 = vst.msk [vmem:[%s204 + $0xf8] sm:$0xff] %vm638, %v2148
        %2361 = vst.msk [vmem:[%s204 + $0x100] sm:$0x3] %vm1197, %v2151
        %2362 = vst.msk [vmem:[%s204 + $0x108] sm:$0xff] %vm638, %v2181
        %2363 = vst.msk [vmem:[%s204 + $0x110] sm:$0xff] %vm638, %v2183
        %2364 = vst.msk [vmem:[%s204 + $0x118] sm:$0x3] %vm1197, %v2186
        %2365 = vst.msk [vmem:[%s204 + $0x120] sm:$0xff] %vm638, %v2216
        %2366 = vst.msk [vmem:[%s204 + $0x128] sm:$0xff] %vm638, %v2218
        %2367 = vst.msk [vmem:[%s204 + $0x130] sm:$0x3] %vm1197, %v2221
        %2368 = vst.msk [vmem:[%s204 + $0x138] sm:$0xff] %vm638, %v2251
        %2369 = vst.msk [vmem:[%s204 + $0x140] sm:$0xff] %vm638, %v2253
        %2370 = vst.msk [vmem:[%s204 + $0x148] sm:$0x3] %vm1197, %v2256
        %2371 = vst.msk [vmem:[%s204 + $0x150] sm:$0xff] %vm638, %v2286
        %2372 = vst.msk [vmem:[%s204 + $0x158] sm:$0xff] %vm638, %v2288
        %2373 = vst.msk [vmem:[%s204 + $0x160] sm:$0x3] %vm1197, %v2291
        %2374 = vst.msk [vmem:[%s204 + $0x168] sm:$0xff] %vm638, %v2321
        %2375 = vst.msk [vmem:[%s204 + $0x170] sm:$0xff] %vm638, %v2323
        %2376 = vst.msk [vmem:[%s204 + $0x178] sm:$0x3] %vm1197, %v2326
        %s2377 = smul.u32 2, %s16
        %p2378 = scmp.lt.s32.totalorder %s2377, 3
        %s2379 = scalar_select %p2378, %s2377, 3
        %s2380 = smul.addr %s2379, 24
        %s2381 = smul.addr %s2380, 8
        %s2382 = scalar_lea.vmem %s3, %s2381
        // Predicated region
        $region41: #{tpu_custom_call.1} parent=31 // pred_check
          %p2383 = pneg %p102
        $region42: #{tpu_custom_call.1} parent=31 // pred_check_branch
          %2385 = sbr.rel (%p2383) target = $region44
        $region43: #{tpu_custom_call.1} parent=31 // pred_region
          %s2386 = smul.u32 2, %s16
        $region44: #{tpu_custom_call.1} parent=31 // pred_fallthru
          _
      $region32: #{tpu_custom_call.1} parent=5 // pred_fallthru
        _
      %p2387 = scmp.le.s32.totalorder 2, %s11
      // Predicated region
      $region45: #{tpu_custom_call.1} parent=5 // pred_check
        %p2388 = pneg %p2387
      $region46: #{tpu_custom_call.1} parent=5 // pred_check_branch
        %2390 = sbr.rel (%p2388) target = $region48
      $region47: #{tpu_custom_call.1} parent=5 // pred_region
        %s2391 = ssub.s32 %s11, 2
        // Predicated region
        $region49: #{tpu_custom_call.1} parent=47 // pred_check
          %p2392 = pneg %p108
        $region50: #{tpu_custom_call.1} parent=47 // pred_check_branch
          %2394 = sbr.rel (%p2392) target = $region52
        $region51: #{tpu_custom_call.1} parent=47 // pred_region
          %s2395 = smul.u32 2, %s17
          %p2396 = scmp.lt.s32.totalorder %s2395, 3
          %s2397 = scalar_select %p2396, %s2395, 3
          %s2398 = smul.addr %s2397, 24
          %s2399 = smul.addr %s2398, 8
          %s2400 = scalar_lea.vmem %s3, %s2399
        $region52: #{tpu_custom_call.1} parent=47 // pred_fallthru
          _
      $region48: #{tpu_custom_call.1} parent=5 // pred_fallthru
        _
    $region6: #{tpu_custom_call.1} parent=1 // loop_footer
      %s15 = sadd.s32 1, %s11
    $region7: #{tpu_custom_call.1} parent=1 // loop_footer_branch
      %10 = sbr.rel target = $region3
    $region8: #{tpu_custom_call.1} parent=1 // loop_exit
      _
    %2401 = vsyncpa [#allocation3], 1
    %s2402 = scalar_lea.sflag [#allocation3], 1
    %2403 = vsyncpa %s2402, 1
    %2404 = vsyncpa [#allocation5], 1

</llo_original>
